<compile_context>
chip_gen: v6e
topology: v6e:2x2x1
jax: 0.10.0
libtpu: 0.0.40
codegen_flags: <defaults>
</compile_context>

<pallas_src>
import functools

import jax
import jax.numpy as jnp
from jax.experimental import pallas as pl
from jax.experimental.pallas import tpu as pltpu

INPUT_SIZE = 784
HIDDEN_SIZE = 500
NUM_CLASSES = 10

HIDDEN_PAD = 512   # 500 -> 512: multiple of 128 lanes -> clean MXU K dim for fc2
OUT_PAD = 128      # 10  -> 128: lane-dense output stores (no masked partial stores)

_DEFAULT_TB = 1024  # batch tile for large batches; bf16 x-tile = 1.57 MiB, fits v7x VMEM easily


def _round_up(n: int, m: int) -> int:
    return ((n + m - 1) // m) * m


def _mlp_kernel(x_ref, w1_ref, b1_ref, w2_ref, b2_ref, o_ref):
    # fc1: (TB, 784) bf16 @ (784, 512) bf16 -> f32 accumulator on the MXU.
    h = jnp.dot(x_ref[...], w1_ref[...], preferred_element_type=jnp.float32)
    # Bias + ReLU in f32 (v5e has no native bf16 VPU; keep the epilogue in f32).
    h = jnp.maximum(h + b1_ref[...], 0.0)
    # fc2: cast activations to bf16 for the MXU, accumulate in f32.
    out = jnp.dot(h.astype(jnp.bfloat16), w2_ref[...],
                  preferred_element_type=jnp.float32)
    o_ref[...] = (out + b2_ref[...]).astype(o_ref.dtype)


def prepare_params(w1, b1, w2, b2):
    """Pad params to lane-aligned shapes and cast weights to bf16.

    Call this ONCE and reuse the result across forward calls to amortize
    the pad/cast work. Biases stay f32.
    """
    w1p = jnp.pad(w1, ((0, 0), (0, HIDDEN_PAD - HIDDEN_SIZE))).astype(jnp.bfloat16)
    b1p = jnp.pad(b1, ((0, 0), (0, HIDDEN_PAD - HIDDEN_SIZE))).astype(jnp.float32)
    w2p = jnp.pad(w2, ((0, HIDDEN_PAD - HIDDEN_SIZE),
                       (0, OUT_PAD - NUM_CLASSES))).astype(jnp.bfloat16)
    b2p = jnp.pad(b2, ((0, 0), (0, OUT_PAD - NUM_CLASSES))).astype(jnp.float32)
    return w1p, b1p, w2p, b2p


@functools.partial(jax.jit, static_argnames=("tb",))
def neural_net_forward(x, w1p, b1p, w2p, b2p, *, tb=_DEFAULT_TB):
    """Fused fc1 -> ReLU -> fc2 forward pass.

    x:   (B, 784) float32 (cast to bf16 internally)
    w1p: (784, 512) bf16, b1p: (1, 512) f32   (from prepare_params)
    w2p: (512, 128) bf16, b2p: (1, 128) f32
    returns (B, 10) float32
    """
    B = x.shape[0]
    # Pick a batch tile: for small batches use one sublane-aligned tile;
    # for large batches tile at `tb` rows and grid over the batch ("parallel"
    # so v7x's two TensorCores split it; weights stay VMEM-resident).
    tb_eff = min(tb, _round_up(B, 8))
    b_pad = _round_up(B, tb_eff)
    grid = (b_pad // tb_eff,)

    x_pad = jnp.pad(x, ((0, b_pad - B), (0, 0))).astype(jnp.bfloat16)

    flops = 2 * b_pad * (INPUT_SIZE * HIDDEN_PAD + HIDDEN_PAD * OUT_PAD)
    bytes_accessed = (
        x_pad.size * 2 + w1p.size * 2 + w2p.size * 2
        + b1p.size * 4 + b2p.size * 4 + b_pad * OUT_PAD * 4
    )

    out = pl.pallas_call(
        _mlp_kernel,
        out_shape=jax.ShapeDtypeStruct((b_pad, OUT_PAD), jnp.float32),
        grid_spec=pltpu.PrefetchScalarGridSpec(
            num_scalar_prefetch=0,
            grid=grid,
            in_specs=[
                pl.BlockSpec((tb_eff, INPUT_SIZE), lambda i: (i, 0)),   # x tile streams
                pl.BlockSpec((INPUT_SIZE, HIDDEN_PAD), lambda i: (0, 0)),  # W1 resident
                pl.BlockSpec((1, HIDDEN_PAD), lambda i: (0, 0)),           # b1 resident
                pl.BlockSpec((HIDDEN_PAD, OUT_PAD), lambda i: (0, 0)),     # W2 resident
                pl.BlockSpec((1, OUT_PAD), lambda i: (0, 0)),              # b2 resident
            ],
            out_specs=pl.BlockSpec((tb_eff, OUT_PAD), lambda i: (i, 0)),
        ),
        compiler_params=pltpu.CompilerParams(
            dimension_semantics=("parallel",),
        ),
        cost_estimate=pl.CostEstimate(
            flops=flops, transcendentals=0, bytes_accessed=bytes_accessed,
        ),
    )(x_pad, w1p, b1p, w2p, b2p)

    # Slice the lane/batch padding back off.
    return out[:B, :NUM_CLASSES]


def init_params(key):
    """Deterministic init mirroring nn.Linear defaults: U(-1/sqrt(fan_in), +1/sqrt(fan_in))."""
    k1, k2, k3, k4 = jax.random.split(key, 4)
    bound1 = 1.0 / jnp.sqrt(jnp.float32(INPUT_SIZE))
    bound2 = 1.0 / jnp.sqrt(jnp.float32(HIDDEN_SIZE))
    w1 = jax.random.uniform(k1, (INPUT_SIZE, HIDDEN_SIZE), jnp.float32, -bound1, bound1)
    b1 = jax.random.uniform(k2, (1, HIDDEN_SIZE), jnp.float32, -bound1, bound1)
    w2 = jax.random.uniform(k3, (HIDDEN_SIZE, NUM_CLASSES), jnp.float32, -bound2, bound2)
    b2 = jax.random.uniform(k4, (1, NUM_CLASSES), jnp.float32, -bound2, bound2)
    return w1, b1, w2, b2


if __name__ == "__main__":
    key = jax.random.PRNGKey(0)
    k_params, k_x = jax.random.split(key)

    batch = 8  # small batch; features fixed by the module (784 -> 500 -> 10)
    x = jax.random.normal(k_x, (batch, INPUT_SIZE), jnp.float32)
    w1, b1, w2, b2 = init_params(k_params)

    # Pad/cast once; reuse across calls.
    w1p, b1p, w2p, b2p = prepare_params(w1, b1, w2, b2)

    out = neural_net_forward(x, w1p, b1p, w2p, b2p)
    out = jax.block_until_ready(out)

    # Reference in plain f32 JAX (same math as the PyTorch module).
    ref = jnp.maximum(x @ w1 + b1, 0.0) @ w2 + b2
    assert out.shape == (batch, NUM_CLASSES)
    # bf16 weights/activations with f32 accumulation -> loosened tolerance.
    assert jnp.allclose(out, ref, atol=2e-2, rtol=2e-2), float(jnp.max(jnp.abs(out - ref)))

    print("KERNEL_OK")
</pallas_src>

<mosaic_0001>
module attributes {stable_mosaic.version = 11 : i64} {
  func.func @_mlp_kernel(%arg0: i32, %arg1: memref<8x784xbf16, #tpu.memory_space<vmem>>, %arg2: memref<784x512xbf16, #tpu.memory_space<vmem>>, %arg3: memref<1x512xf32, #tpu.memory_space<vmem>>, %arg4: memref<512x128xbf16, #tpu.memory_space<vmem>>, %arg5: memref<1x128xf32, #tpu.memory_space<vmem>>, %arg6: memref<8x128xf32, #tpu.memory_space<vmem>>) attributes {dimension_semantics = [#tpu.dimension_semantics<parallel>], iteration_bounds = array<i64: 1>, scalar_prefetch = 0 : i64, scratch_operands = 0 : i64, tpu.core_type = #tpu.core_type<tc>, window_params = [{transform_indices = @transform_0, window_bounds = array<i64: 8, 784>}, {pipeline_mode = #tpu.pipeline_mode<synchronous>, transform_indices = @transform_1, window_bounds = array<i64: 784, 512>}, {pipeline_mode = #tpu.pipeline_mode<synchronous>, transform_indices = @transform_2, window_bounds = array<i64: 1, 512>}, {pipeline_mode = #tpu.pipeline_mode<synchronous>, transform_indices = @transform_3, window_bounds = array<i64: 512, 128>}, {pipeline_mode = #tpu.pipeline_mode<synchronous>, transform_indices = @transform_4, window_bounds = array<i64: 1, 128>}, {transform_indices = @transform_5, window_bounds = array<i64: 8, 128>}]} {
    %c0 = arith.constant 0 : index
    %c0_0 = arith.constant 0 : index
    %0 = vector.load %arg1[%c0, %c0_0] : memref<8x784xbf16, #tpu.memory_space<vmem>>, vector<8x784xbf16>
    %c0_1 = arith.constant 0 : index
    %c0_2 = arith.constant 0 : index
    %1 = vector.load %arg2[%c0_1, %c0_2] : memref<784x512xbf16, #tpu.memory_space<vmem>>, vector<784x512xbf16>
    %cst = arith.constant dense<0.000000e+00> : vector<8x512xf32>
    %2 = tpu.matmul %0, %1, %cst {dimension_numbers = #tpu.dot_dimension_numbers<[1], [0], [0], [1], [0, 0, 1, 1], [], []>} : vector<8x784xbf16>, vector<784x512xbf16>, vector<8x512xf32> -> vector<8x512xf32>
    %c0_3 = arith.constant 0 : index
    %c0_4 = arith.constant 0 : index
    %3 = vector.load %arg3[%c0_3, %c0_4] : memref<1x512xf32, #tpu.memory_space<vmem>>, vector<1x512xf32>
    %4 = vector.broadcast %3 : vector<1x512xf32> to vector<8x512xf32>
    %5 = arith.addf %2, %4 : vector<8x512xf32>
    %cst_5 = arith.constant 0.000000e+00 : f32
    %6 = vector.broadcast %cst_5 : f32 to vector<8x512xf32>
    %7 = arith.maximumf %5, %6 : vector<8x512xf32>
    %8 = arith.truncf %7 : vector<8x512xf32> to vector<8x512xbf16>
    %c0_6 = arith.constant 0 : index
    %c0_7 = arith.constant 0 : index
    %9 = vector.load %arg4[%c0_6, %c0_7] : memref<512x128xbf16, #tpu.memory_space<vmem>>, vector<512x128xbf16>
    %cst_8 = arith.constant dense<0.000000e+00> : vector<8x128xf32>
    %10 = tpu.matmul %8, %9, %cst_8 {dimension_numbers = #tpu.dot_dimension_numbers<[1], [0], [0], [1], [0, 0, 1, 1], [], []>} : vector<8x512xbf16>, vector<512x128xbf16>, vector<8x128xf32> -> vector<8x128xf32>
    %c0_9 = arith.constant 0 : index
    %c0_10 = arith.constant 0 : index
    %11 = vector.load %arg5[%c0_9, %c0_10] : memref<1x128xf32, #tpu.memory_space<vmem>>, vector<1x128xf32>
    %12 = vector.broadcast %11 : vector<1x128xf32> to vector<8x128xf32>
    %13 = arith.addf %10, %12 : vector<8x128xf32>
    %c0_11 = arith.constant 0 : index
    %c0_12 = arith.constant 0 : index
    %14 = vector.load %arg6[%c0_11, %c0_12] : memref<8x128xf32, #tpu.memory_space<vmem>>, vector<8x128xf32>
    tpu.vector_store %arg6[%c0_11, %c0_12], %13 {strides = array<i32>} : memref<8x128xf32, #tpu.memory_space<vmem>>, vector<8x128xf32>,
    return
  }
  func.func @transform_0(%arg0: i32) -> (i32, i32) {
    %c0_i32 = arith.constant 0 : i32
    %c0_i32_0 = arith.constant 0 : i32
    return %arg0, %c0_i32 : i32, i32
  }
  func.func @transform_1(%arg0: i32) -> (i32, i32) {
    %c0_i32 = arith.constant 0 : i32
    %c0_i32_0 = arith.constant 0 : i32
    %c0_i32_1 = arith.constant 0 : i32
    return %c0_i32, %c0_i32_0 : i32, i32
  }
  func.func @transform_2(%arg0: i32) -> (i32, i32) {
    %c0_i32 = arith.constant 0 : i32
    %c0_i32_0 = arith.constant 0 : i32
    %c0_i32_1 = arith.constant 0 : i32
    return %c0_i32, %c0_i32_0 : i32, i32
  }
  func.func @transform_3(%arg0: i32) -> (i32, i32) {
    %c0_i32 = arith.constant 0 : i32
    %c0_i32_0 = arith.constant 0 : i32
    %c0_i32_1 = arith.constant 0 : i32
    return %c0_i32, %c0_i32_0 : i32, i32
  }
  func.func @transform_4(%arg0: i32) -> (i32, i32) {
    %c0_i32 = arith.constant 0 : i32
    %c0_i32_0 = arith.constant 0 : i32
    %c0_i32_1 = arith.constant 0 : i32
    return %c0_i32, %c0_i32_0 : i32, i32
  }
  func.func @transform_5(%arg0: i32) -> (i32, i32) {
    %c0_i32 = arith.constant 0 : i32
    %c0_i32_0 = arith.constant 0 : i32
    return %arg0, %c0_i32 : i32, i32
  }
}

</mosaic_0001>

<llo_original>
// kernel: neural_net_forward.1
$region0: #{neural_net_forward.1}
  #allocation0 [shape = 'u32[]', space=smem, size = 0x4, offset = 0x4, fixed_abs, tag = 'smem constant byte address 0x4 - core index']
  #allocation1 [shape = 'u32[144,128]{1,0:T(1,128)}', space=vmem, size = 0x12000, scoped, tag = 'internal scratch']
  %s0 = inlined_call_operand.vmem [shape: bf16[8,784], index: 0, kind: input, shape index: {}]
  %s1 = inlined_call_operand.hbm [shape: bf16[784,512], index: 1, kind: input, shape index: {}]
  %s2 = inlined_call_operand.vmem [shape: f32[1,512], index: 2, kind: input, shape index: {}]
  %s3 = inlined_call_operand.hbm [shape: bf16[512,128], index: 3, kind: input, shape index: {}]
  %s4 = inlined_call_operand.vmem [shape: f32[1,128], index: 4, kind: input, shape index: {}]
  %s5 = inlined_call_operand.hbm [shape: f32[8,128], index: 5, kind: output, shape index: {}]
  %s6 = sld [smem:[#allocation0]]
  $region38: #{neural_net_forward.1} parent=0
    _
  %s8 = ssub.s32 1, %s6
  %s9 = scalar_select 0, %s8, %s6
  $region1: #{neural_net_forward.1} parent=0
    #allocation2 [shape = 'u8[802816]{0}', space=vmem, size = 0xc4000, scoped, tag = 'input window, operand 1, single buffered']
    #allocation3 [shape = 's32[1]{0}', space=sflag, size = 0x4, scoped, tag = 'scoped memory for neural_net_forward.1']
    #allocation4 [shape = 's32[1]{0}', space=sflag, size = 0x4, scoped, tag = 'scoped memory for neural_net_forward.1']
    #allocation5 [shape = 'u8[131072]{0}', space=vmem, size = 0x20000, scoped, tag = 'input window, operand 3, single buffered']
    #allocation6 [shape = 's32[1]{0}', space=sflag, size = 0x4, scoped, tag = 'scoped memory for neural_net_forward.1']
    #allocation7 [shape = 'u8[4096]{0}', space=vmem, size = 0x1000, scoped, tag = 'output window, operand 0, single buffered']
    %10 = vsyncpa [#allocation3], 0
    %11 = vsyncpa [#allocation6], 0
    %12 = vsyncpa [#allocation4], 0
    // Predicated region
    $region2: #{neural_net_forward.1} parent=1 // pred_check
      _
    $region3: #{neural_net_forward.1} parent=1 // pred_check_branch
      %14 = sbr.rel (0) target = $region5
    $region4: #{neural_net_forward.1} parent=1 // pred_region
      _
    $region5: #{neural_net_forward.1} parent=1 // pred_fallthru
      _
    // Predicated region
    $region6: #{neural_net_forward.1} parent=1 // pred_check
      _
    $region7: #{neural_net_forward.1} parent=1 // pred_check_branch
      %16 = sbr.rel (0) target = $region9
    $region8: #{neural_net_forward.1} parent=1 // pred_region
      %s18 = ssub.s32 25088, 25088
      %19 = vsyncadd [#allocation3], %s18
      %s20 = sshll.u32 [#allocation2], 4
      %s21 = int_to_ptr.vmem [resolvable:$true] %s20
      %26 = dma.hbm_to_vmem [thread:$0]  %s1, 25088, %s21, [#allocation3], 256, 256, 16
    $region9: #{neural_net_forward.1} parent=1 // pred_fallthru
      _
    // Predicated region
    $region10: #{neural_net_forward.1} parent=1 // pred_check
      _
    $region11: #{neural_net_forward.1} parent=1 // pred_check_branch
      %28 = sbr.rel (0) target = $region13
    $region12: #{neural_net_forward.1} parent=1 // pred_region
      _
    $region13: #{neural_net_forward.1} parent=1 // pred_fallthru
      _
    // Predicated region
    $region14: #{neural_net_forward.1} parent=1 // pred_check
      _
    $region15: #{neural_net_forward.1} parent=1 // pred_check_branch
      %30 = sbr.rel (0) target = $region17
    $region16: #{neural_net_forward.1} parent=1 // pred_region
      %s32 = ssub.s32 4096, 4096
      %33 = vsyncadd [#allocation6], %s32
      %s34 = sshll.u32 [#allocation5], 4
      %s35 = int_to_ptr.vmem [resolvable:$true] %s34
      %40 = dma.hbm_to_vmem [thread:$0]  %s3, 4096, %s35, [#allocation6], 64, 64, 4
    $region17: #{neural_net_forward.1} parent=1 // pred_fallthru
      _
    // Predicated region
    $region18: #{neural_net_forward.1} parent=1 // pred_check
      _
    $region19: #{neural_net_forward.1} parent=1 // pred_check_branch
      %42 = sbr.rel (0) target = $region21
    $region20: #{neural_net_forward.1} parent=1 // pred_region
      _
    $region21: #{neural_net_forward.1} parent=1 // pred_fallthru
      _
    // Predicated region
    $region22: #{neural_net_forward.1} parent=1 // pred_check
      _
    $region23: #{neural_net_forward.1} parent=1 // pred_check_branch
      %44 = sbr.rel (0) target = $region25
    $region24: #{neural_net_forward.1} parent=1 // pred_region
      %45 = dma.done [#allocation3], 25088
    $region25: #{neural_net_forward.1} parent=1 // pred_fallthru
      _
    // Predicated region
    $region26: #{neural_net_forward.1} parent=1 // pred_check
      _
    $region27: #{neural_net_forward.1} parent=1 // pred_check_branch
      %47 = sbr.rel (0) target = $region29
    $region28: #{neural_net_forward.1} parent=1 // pred_region
      %48 = dma.done [#allocation6], 4096
    $region29: #{neural_net_forward.1} parent=1 // pred_fallthru
      _
    %v50 = vld [vmem:[%s0] sm:$0xff]
    %v51 = vld [vmem:[%s0 + $0x8] sm:$0xff]
    %v52 = vld [vmem:[%s0 + $0x10] sm:$0xff]
    %v53 = vld [vmem:[%s0 + $0x18] sm:$0xf]
    %v54 = vld [vmem:[#allocation2] sm:$0xff]
    %v55 = vld [vmem:[#allocation2 + $0x8] sm:$0xff]
    %v56 = vld [vmem:[#allocation2 + $0x10] sm:$0xff]
    %v57 = vld [vmem:[#allocation2 + $0x18] sm:$0xff]
    %v58 = vld [vmem:[#allocation2 + $0x20] sm:$0xff]
    %v59 = vld [vmem:[#allocation2 + $0x28] sm:$0xff]
    %v60 = vld [vmem:[#allocation2 + $0x30] sm:$0xff]
    %v61 = vld [vmem:[#allocation2 + $0x38] sm:$0xff]
    %v62 = vld [vmem:[#allocation2 + $0x40] sm:$0xff]
    %v63 = vld [vmem:[#allocation2 + $0x48] sm:$0xff]
    %v64 = vld [vmem:[#allocation2 + $0x50] sm:$0xff]
    %v65 = vld [vmem:[#allocation2 + $0x58] sm:$0xff]
    %v66 = vld [vmem:[#allocation2 + $0x60] sm:$0xff]
    %v67 = vld [vmem:[#allocation2 + $0x68] sm:$0xff]
    %v68 = vld [vmem:[#allocation2 + $0x70] sm:$0xff]
    %v69 = vld [vmem:[#allocation2 + $0x78] sm:$0xff]
    %v70 = vld [vmem:[#allocation2 + $0x80] sm:$0xff]
    %v71 = vld [vmem:[#allocation2 + $0x88] sm:$0xff]
    %v72 = vld [vmem:[#allocation2 + $0x90] sm:$0xff]
    %v73 = vld [vmem:[#allocation2 + $0x98] sm:$0xff]
    %v74 = vld [vmem:[#allocation2 + $0xa0] sm:$0xff]
    %v75 = vld [vmem:[#allocation2 + $0xa8] sm:$0xff]
    %v76 = vld [vmem:[#allocation2 + $0xb0] sm:$0xff]
    %v77 = vld [vmem:[#allocation2 + $0xb8] sm:$0xff]
    %v78 = vld [vmem:[#allocation2 + $0xc0] sm:$0xff]
    %v79 = vld [vmem:[#allocation2 + $0xc8] sm:$0xff]
    %v80 = vld [vmem:[#allocation2 + $0xd0] sm:$0xff]
    %v81 = vld [vmem:[#allocation2 + $0xd8] sm:$0xff]
    %v82 = vld [vmem:[#allocation2 + $0xe0] sm:$0xff]
    %v83 = vld [vmem:[#allocation2 + $0xe8] sm:$0xff]
    %v84 = vld [vmem:[#allocation2 + $0xf0] sm:$0xff]
    %v85 = vld [vmem:[#allocation2 + $0xf8] sm:$0xff]
    %v86 = vld [vmem:[#allocation2 + $0x100] sm:$0xff]
    %v87 = vld [vmem:[#allocation2 + $0x108] sm:$0xff]
    %v88 = vld [vmem:[#allocation2 + $0x110] sm:$0xff]
    %v89 = vld [vmem:[#allocation2 + $0x118] sm:$0xff]
    %v90 = vld [vmem:[#allocation2 + $0x120] sm:$0xff]
    %v91 = vld [vmem:[#allocation2 + $0x128] sm:$0xff]
    %v92 = vld [vmem:[#allocation2 + $0x130] sm:$0xff]
    %v93 = vld [vmem:[#allocation2 + $0x138] sm:$0xff]
    %v94 = vld [vmem:[#allocation2 + $0x140] sm:$0xff]
    %v95 = vld [vmem:[#allocation2 + $0x148] sm:$0xff]
    %v96 = vld [vmem:[#allocation2 + $0x150] sm:$0xff]
    %v97 = vld [vmem:[#allocation2 + $0x158] sm:$0xff]
    %v98 = vld [vmem:[#allocation2 + $0x160] sm:$0xff]
    %v99 = vld [vmem:[#allocation2 + $0x168] sm:$0xff]
    %v100 = vld [vmem:[#allocation2 + $0x170] sm:$0xff]
    %v101 = vld [vmem:[#allocation2 + $0x178] sm:$0xff]
    %v102 = vld [vmem:[#allocation2 + $0x180] sm:$0xff]
    %v103 = vld [vmem:[#allocation2 + $0x188] sm:$0xff]
    %v104 = vld [vmem:[#allocation2 + $0x190] sm:$0xff]
    %v105 = vld [vmem:[#allocation2 + $0x198] sm:$0xff]
    %v106 = vld [vmem:[#allocation2 + $0x1a0] sm:$0xff]
    %v107 = vld [vmem:[#allocation2 + $0x1a8] sm:$0xff]
    %v108 = vld [vmem:[#allocation2 + $0x1b0] sm:$0xff]
    %v109 = vld [vmem:[#allocation2 + $0x1b8] sm:$0xff]
    %v110 = vld [vmem:[#allocation2 + $0x1c0] sm:$0xff]
    %v111 = vld [vmem:[#allocation2 + $0x1c8] sm:$0xff]
    %v112 = vld [vmem:[#allocation2 + $0x1d0] sm:$0xff]
    %v113 = vld [vmem:[#allocation2 + $0x1d8] sm:$0xff]
    %v114 = vld [vmem:[#allocation2 + $0x1e0] sm:$0xff]
    %v115 = vld [vmem:[#allocation2 + $0x1e8] sm:$0xff]
    %v116 = vld [vmem:[#allocation2 + $0x1f0] sm:$0xff]
    %v117 = vld [vmem:[#allocation2 + $0x1f8] sm:$0xff]
    %v118 = vld [vmem:[#allocation2 + $0x200] sm:$0xff]
    %v119 = vld [vmem:[#allocation2 + $0x208] sm:$0xff]
    %v120 = vld [vmem:[#allocation2 + $0x210] sm:$0xff]
    %v121 = vld [vmem:[#allocation2 + $0x218] sm:$0xff]
    %v122 = vld [vmem:[#allocation2 + $0x220] sm:$0xff]
    %v123 = vld [vmem:[#allocation2 + $0x228] sm:$0xff]
    %v124 = vld [vmem:[#allocation2 + $0x230] sm:$0xff]
    %v125 = vld [vmem:[#allocation2 + $0x238] sm:$0xff]
    %v126 = vld [vmem:[#allocation2 + $0x240] sm:$0xff]
    %v127 = vld [vmem:[#allocation2 + $0x248] sm:$0xff]
    %v128 = vld [vmem:[#allocation2 + $0x250] sm:$0xff]
    %v129 = vld [vmem:[#allocation2 + $0x258] sm:$0xff]
    %v130 = vld [vmem:[#allocation2 + $0x260] sm:$0xff]
    %v131 = vld [vmem:[#allocation2 + $0x268] sm:$0xff]
    %v132 = vld [vmem:[#allocation2 + $0x270] sm:$0xff]
    %v133 = vld [vmem:[#allocation2 + $0x278] sm:$0xff]
    %v134 = vld [vmem:[#allocation2 + $0x280] sm:$0xff]
    %v135 = vld [vmem:[#allocation2 + $0x288] sm:$0xff]
    %v136 = vld [vmem:[#allocation2 + $0x290] sm:$0xff]
    %v137 = vld [vmem:[#allocation2 + $0x298] sm:$0xff]
    %v138 = vld [vmem:[#allocation2 + $0x2a0] sm:$0xff]
    %v139 = vld [vmem:[#allocation2 + $0x2a8] sm:$0xff]
    %v140 = vld [vmem:[#allocation2 + $0x2b0] sm:$0xff]
    %v141 = vld [vmem:[#allocation2 + $0x2b8] sm:$0xff]
    %v142 = vld [vmem:[#allocation2 + $0x2c0] sm:$0xff]
    %v143 = vld [vmem:[#allocation2 + $0x2c8] sm:$0xff]
    %v144 = vld [vmem:[#allocation2 + $0x2d0] sm:$0xff]
    %v145 = vld [vmem:[#allocation2 + $0x2d8] sm:$0xff]
    %v146 = vld [vmem:[#allocation2 + $0x2e0] sm:$0xff]
    %v147 = vld [vmem:[#allocation2 + $0x2e8] sm:$0xff]
    %v148 = vld [vmem:[#allocation2 + $0x2f0] sm:$0xff]
    %v149 = vld [vmem:[#allocation2 + $0x2f8] sm:$0xff]
    %v150 = vld [vmem:[#allocation2 + $0x300] sm:$0xff]
    %v151 = vld [vmem:[#allocation2 + $0x308] sm:$0xff]
    %v152 = vld [vmem:[#allocation2 + $0x310] sm:$0xff]
    %v153 = vld [vmem:[#allocation2 + $0x318] sm:$0xff]
    %v154 = vld [vmem:[#allocation2 + $0x320] sm:$0xff]
    %v155 = vld [vmem:[#allocation2 + $0x328] sm:$0xff]
    %v156 = vld [vmem:[#allocation2 + $0x330] sm:$0xff]
    %v157 = vld [vmem:[#allocation2 + $0x338] sm:$0xff]
    %v158 = vld [vmem:[#allocation2 + $0x340] sm:$0xff]
    %v159 = vld [vmem:[#allocation2 + $0x348] sm:$0xff]
    %v160 = vld [vmem:[#allocation2 + $0x350] sm:$0xff]
    %v161 = vld [vmem:[#allocation2 + $0x358] sm:$0xff]
    %v162 = vld [vmem:[#allocation2 + $0x360] sm:$0xff]
    %v163 = vld [vmem:[#allocation2 + $0x368] sm:$0xff]
    %v164 = vld [vmem:[#allocation2 + $0x370] sm:$0xff]
    %v165 = vld [vmem:[#allocation2 + $0x378] sm:$0xff]
    %v166 = vld [vmem:[#allocation2 + $0x380] sm:$0xff]
    %v167 = vld [vmem:[#allocation2 + $0x388] sm:$0xff]
    %v168 = vld [vmem:[#allocation2 + $0x390] sm:$0xff]
    %v169 = vld [vmem:[#allocation2 + $0x398] sm:$0xff]
    %v170 = vld [vmem:[#allocation2 + $0x3a0] sm:$0xff]
    %v171 = vld [vmem:[#allocation2 + $0x3a8] sm:$0xff]
    %v172 = vld [vmem:[#allocation2 + $0x3b0] sm:$0xff]
    %v173 = vld [vmem:[#allocation2 + $0x3b8] sm:$0xff]
    %v174 = vld [vmem:[#allocation2 + $0x3c0] sm:$0xff]
    %v175 = vld [vmem:[#allocation2 + $0x3c8] sm:$0xff]
    %v176 = vld [vmem:[#allocation2 + $0x3d0] sm:$0xff]
    %v177 = vld [vmem:[#allocation2 + $0x3d8] sm:$0xff]
    %v178 = vld [vmem:[#allocation2 + $0x3e0] sm:$0xff]
    %v179 = vld [vmem:[#allocation2 + $0x3e8] sm:$0xff]
    %v180 = vld [vmem:[#allocation2 + $0x3f0] sm:$0xff]
    %v181 = vld [vmem:[#allocation2 + $0x3f8] sm:$0xff]
    %v182 = vld [vmem:[#allocation2 + $0x400] sm:$0xff]
    %v183 = vld [vmem:[#allocation2 + $0x408] sm:$0xff]
    %v184 = vld [vmem:[#allocation2 + $0x410] sm:$0xff]
    %v185 = vld [vmem:[#allocation2 + $0x418] sm:$0xff]
    %v186 = vld [vmem:[#allocation2 + $0x420] sm:$0xff]
    %v187 = vld [vmem:[#allocation2 + $0x428] sm:$0xff]
    %v188 = vld [vmem:[#allocation2 + $0x430] sm:$0xff]
    %v189 = vld [vmem:[#allocation2 + $0x438] sm:$0xff]
    %v190 = vld [vmem:[#allocation2 + $0x440] sm:$0xff]
    %v191 = vld [vmem:[#allocation2 + $0x448] sm:$0xff]
    %v192 = vld [vmem:[#allocation2 + $0x450] sm:$0xff]
    %v193 = vld [vmem:[#allocation2 + $0x458] sm:$0xff]
    %v194 = vld [vmem:[#allocation2 + $0x460] sm:$0xff]
    %v195 = vld [vmem:[#allocation2 + $0x468] sm:$0xff]
    %v196 = vld [vmem:[#allocation2 + $0x470] sm:$0xff]
    %v197 = vld [vmem:[#allocation2 + $0x478] sm:$0xff]
    %v198 = vld [vmem:[#allocation2 + $0x480] sm:$0xff]
    %v199 = vld [vmem:[#allocation2 + $0x488] sm:$0xff]
    %v200 = vld [vmem:[#allocation2 + $0x490] sm:$0xff]
    %v201 = vld [vmem:[#allocation2 + $0x498] sm:$0xff]
    %v202 = vld [vmem:[#allocation2 + $0x4a0] sm:$0xff]
    %v203 = vld [vmem:[#allocation2 + $0x4a8] sm:$0xff]
    %v204 = vld [vmem:[#allocation2 + $0x4b0] sm:$0xff]
    %v205 = vld [vmem:[#allocation2 + $0x4b8] sm:$0xff]
    %v206 = vld [vmem:[#allocation2 + $0x4c0] sm:$0xff]
    %v207 = vld [vmem:[#allocation2 + $0x4c8] sm:$0xff]
    %v208 = vld [vmem:[#allocation2 + $0x4d0] sm:$0xff]
    %v209 = vld [vmem:[#allocation2 + $0x4d8] sm:$0xff]
    %v210 = vld [vmem:[#allocation2 + $0x4e0] sm:$0xff]
    %v211 = vld [vmem:[#allocation2 + $0x4e8] sm:$0xff]
    %v212 = vld [vmem:[#allocation2 + $0x4f0] sm:$0xff]
    %v213 = vld [vmem:[#allocation2 + $0x4f8] sm:$0xff]
    %v214 = vld [vmem:[#allocation2 + $0x500] sm:$0xff]
    %v215 = vld [vmem:[#allocation2 + $0x508] sm:$0xff]
    %v216 = vld [vmem:[#allocation2 + $0x510] sm:$0xff]
    %v217 = vld [vmem:[#allocation2 + $0x518] sm:$0xff]
    %v218 = vld [vmem:[#allocation2 + $0x520] sm:$0xff]
    %v219 = vld [vmem:[#allocation2 + $0x528] sm:$0xff]
    %v220 = vld [vmem:[#allocation2 + $0x530] sm:$0xff]
    %v221 = vld [vmem:[#allocation2 + $0x538] sm:$0xff]
    %v222 = vld [vmem:[#allocation2 + $0x540] sm:$0xff]
    %v223 = vld [vmem:[#allocation2 + $0x548] sm:$0xff]
    %v224 = vld [vmem:[#allocation2 + $0x550] sm:$0xff]
    %v225 = vld [vmem:[#allocation2 + $0x558] sm:$0xff]
    %v226 = vld [vmem:[#allocation2 + $0x560] sm:$0xff]
    %v227 = vld [vmem:[#allocation2 + $0x568] sm:$0xff]
    %v228 = vld [vmem:[#allocation2 + $0x570] sm:$0xff]
    %v229 = vld [vmem:[#allocation2 + $0x578] sm:$0xff]
    %v230 = vld [vmem:[#allocation2 + $0x580] sm:$0xff]
    %v231 = vld [vmem:[#allocation2 + $0x588] sm:$0xff]
    %v232 = vld [vmem:[#allocation2 + $0x590] sm:$0xff]
    %v233 = vld [vmem:[#allocation2 + $0x598] sm:$0xff]
    %v234 = vld [vmem:[#allocation2 + $0x5a0] sm:$0xff]
    %v235 = vld [vmem:[#allocation2 + $0x5a8] sm:$0xff]
    %v236 = vld [vmem:[#allocation2 + $0x5b0] sm:$0xff]
    %v237 = vld [vmem:[#allocation2 + $0x5b8] sm:$0xff]
    %v238 = vld [vmem:[#allocation2 + $0x5c0] sm:$0xff]
    %v239 = vld [vmem:[#allocation2 + $0x5c8] sm:$0xff]
    %v240 = vld [vmem:[#allocation2 + $0x5d0] sm:$0xff]
    %v241 = vld [vmem:[#allocation2 + $0x5d8] sm:$0xff]
    %v242 = vld [vmem:[#allocation2 + $0x5e0] sm:$0xff]
    %v243 = vld [vmem:[#allocation2 + $0x5e8] sm:$0xff]
    %v244 = vld [vmem:[#allocation2 + $0x5f0] sm:$0xff]
    %v245 = vld [vmem:[#allocation2 + $0x5f8] sm:$0xff]
    %v246 = vld [vmem:[#allocation2 + $0x600] sm:$0xff]
    %v247 = vld [vmem:[#allocation2 + $0x608] sm:$0xff]
    %v248 = vld [vmem:[#allocation2 + $0x610] sm:$0xff]
    %v249 = vld [vmem:[#allocation2 + $0x618] sm:$0xff]
    %v250 = vld [vmem:[%s2] sm:$0xf]
    %v252 = vlaneseq
    %v253 = vshrl.u32 %v252, 7
    %v254 = vsub.s32 0, %v253
    %v255 = vrot.slane %v250, %v254
    %v256 = vlaneseq
    %v257 = vshrl.u32 %v256, 7
    %v258 = vsub.s32 1, %v257
    %v259 = vrot.slane %v250, %v258
    %v260 = vlaneseq
    %v261 = vshrl.u32 %v260, 7
    %v262 = vsub.s32 2, %v261
    %v263 = vrot.slane %v250, %v262
    %v264 = vlaneseq
    %v265 = vshrl.u32 %v264, 7
    %v266 = vsub.s32 3, %v265
    %v267 = vrot.slane %v250, %v266
    %v276 = vunpack.c.l.b16 %v50
    %v277 = vunpack.c.h.b16 %v50
    %v278 = vunpack.c.l.b16 %v51
    %v279 = vunpack.c.h.b16 %v51
    %v280 = vunpack.c.l.b16 %v52
    %v281 = vunpack.c.h.b16 %v52
    %v282 = vunpack.c.l.b16 %v53
    %v283 = vpack.c.b16 %v276, %v276
    %v284 = vpack.c.b16 %v277, %v277
    %v285 = vpack.c.b16 %v278, %v278
    %v286 = vpack.c.b16 %v279, %v279
    %v287 = vpack.c.b16 %v280, %v280
    %v288 = vpack.c.b16 %v281, %v281
    %v289 = vpack.c.b16 %v282, %v282
    %v492 = vunpack.c.l.b16 %v54
    %v493 = vunpack.c.h.b16 %v54
    %v494 = vunpack.c.l.b16 %v55
    %v495 = vunpack.c.h.b16 %v55
    %v496 = vunpack.c.l.b16 %v56
    %v497 = vunpack.c.h.b16 %v56
    %v498 = vunpack.c.l.b16 %v57
    %v499 = vunpack.c.h.b16 %v57
    %v500 = vunpack.c.l.b16 %v58
    %v501 = vunpack.c.h.b16 %v58
    %v502 = vunpack.c.l.b16 %v59
    %v503 = vunpack.c.h.b16 %v59
    %v504 = vunpack.c.l.b16 %v60
    %v505 = vunpack.c.h.b16 %v60
    %v506 = vunpack.c.l.b16 %v61
    %v507 = vunpack.c.h.b16 %v61
    %v508 = vunpack.c.l.b16 %v62
    %v509 = vunpack.c.h.b16 %v62
    %v510 = vunpack.c.l.b16 %v63
    %v511 = vunpack.c.h.b16 %v63
    %v512 = vunpack.c.l.b16 %v64
    %v513 = vunpack.c.h.b16 %v64
    %v514 = vunpack.c.l.b16 %v65
    %v515 = vunpack.c.h.b16 %v65
    %v516 = vunpack.c.l.b16 %v66
    %v517 = vunpack.c.h.b16 %v66
    %v518 = vunpack.c.l.b16 %v67
    %v519 = vunpack.c.h.b16 %v67
    %v520 = vunpack.c.l.b16 %v68
    %v521 = vunpack.c.h.b16 %v68
    %v522 = vunpack.c.l.b16 %v69
    %v523 = vunpack.c.h.b16 %v69
    %v524 = vunpack.c.l.b16 %v70
    %v525 = vunpack.c.h.b16 %v70
    %v526 = vunpack.c.l.b16 %v71
    %v527 = vunpack.c.h.b16 %v71
    %v528 = vunpack.c.l.b16 %v72
    %v529 = vunpack.c.h.b16 %v72
    %v530 = vunpack.c.l.b16 %v73
    %v531 = vunpack.c.h.b16 %v73
    %v532 = vunpack.c.l.b16 %v74
    %v533 = vunpack.c.h.b16 %v74
    %v534 = vunpack.c.l.b16 %v75
    %v535 = vunpack.c.h.b16 %v75
    %v536 = vunpack.c.l.b16 %v76
    %v537 = vunpack.c.h.b16 %v76
    %v538 = vunpack.c.l.b16 %v77
    %v539 = vunpack.c.h.b16 %v77
    %v540 = vunpack.c.l.b16 %v78
    %v541 = vunpack.c.h.b16 %v78
    %v542 = vunpack.c.l.b16 %v79
    %v543 = vunpack.c.h.b16 %v79
    %v544 = vunpack.c.l.b16 %v80
    %v545 = vunpack.c.h.b16 %v80
    %v546 = vunpack.c.l.b16 %v81
    %v547 = vunpack.c.h.b16 %v81
    %v548 = vunpack.c.l.b16 %v82
    %v549 = vunpack.c.h.b16 %v82
    %v550 = vunpack.c.l.b16 %v83
    %v551 = vunpack.c.h.b16 %v83
    %v552 = vunpack.c.l.b16 %v84
    %v553 = vunpack.c.h.b16 %v84
    %v554 = vunpack.c.l.b16 %v85
    %v555 = vunpack.c.h.b16 %v85
    %v556 = vunpack.c.l.b16 %v86
    %v557 = vunpack.c.h.b16 %v86
    %v558 = vunpack.c.l.b16 %v87
    %v559 = vunpack.c.h.b16 %v87
    %v560 = vunpack.c.l.b16 %v88
    %v561 = vunpack.c.h.b16 %v88
    %v562 = vunpack.c.l.b16 %v89
    %v563 = vunpack.c.h.b16 %v89
    %v564 = vunpack.c.l.b16 %v90
    %v565 = vunpack.c.h.b16 %v90
    %v566 = vunpack.c.l.b16 %v91
    %v567 = vunpack.c.h.b16 %v91
    %v568 = vunpack.c.l.b16 %v92
    %v569 = vunpack.c.h.b16 %v92
    %v570 = vunpack.c.l.b16 %v93
    %v571 = vunpack.c.h.b16 %v93
    %v572 = vunpack.c.l.b16 %v94
    %v573 = vunpack.c.h.b16 %v94
    %v574 = vunpack.c.l.b16 %v95
    %v575 = vunpack.c.h.b16 %v95
    %v576 = vunpack.c.l.b16 %v96
    %v577 = vunpack.c.h.b16 %v96
    %v578 = vunpack.c.l.b16 %v97
    %v579 = vunpack.c.h.b16 %v97
    %v580 = vunpack.c.l.b16 %v98
    %v581 = vunpack.c.h.b16 %v98
    %v582 = vunpack.c.l.b16 %v99
    %v583 = vunpack.c.h.b16 %v99
    %v584 = vunpack.c.l.b16 %v100
    %v585 = vunpack.c.h.b16 %v100
    %v586 = vunpack.c.l.b16 %v101
    %v587 = vunpack.c.h.b16 %v101
    %v588 = vunpack.c.l.b16 %v102
    %v589 = vunpack.c.h.b16 %v102
    %v590 = vunpack.c.l.b16 %v103
    %v591 = vunpack.c.h.b16 %v103
    %v592 = vunpack.c.l.b16 %v104
    %v593 = vunpack.c.h.b16 %v104
    %v594 = vunpack.c.l.b16 %v105
    %v595 = vunpack.c.h.b16 %v105
    %v596 = vunpack.c.l.b16 %v106
    %v597 = vunpack.c.h.b16 %v106
    %v598 = vunpack.c.l.b16 %v107
    %v599 = vunpack.c.h.b16 %v107
    %v600 = vunpack.c.l.b16 %v108
    %v601 = vunpack.c.h.b16 %v108
    %v602 = vunpack.c.l.b16 %v109
    %v603 = vunpack.c.h.b16 %v109
    %v604 = vunpack.c.l.b16 %v110
    %v605 = vunpack.c.h.b16 %v110
    %v606 = vunpack.c.l.b16 %v111
    %v607 = vunpack.c.h.b16 %v111
    %v608 = vunpack.c.l.b16 %v112
    %v609 = vunpack.c.h.b16 %v112
    %v610 = vunpack.c.l.b16 %v113
    %v611 = vunpack.c.h.b16 %v113
    %v612 = vunpack.c.l.b16 %v114
    %v613 = vunpack.c.h.b16 %v114
    %v614 = vunpack.c.l.b16 %v115
    %v615 = vunpack.c.h.b16 %v115
    %v616 = vunpack.c.l.b16 %v116
    %v617 = vunpack.c.h.b16 %v116
    %v618 = vunpack.c.l.b16 %v117
    %v619 = vunpack.c.h.b16 %v117
    %v620 = vunpack.c.l.b16 %v118
    %v621 = vunpack.c.h.b16 %v118
    %v622 = vunpack.c.l.b16 %v119
    %v623 = vunpack.c.h.b16 %v119
    %v624 = vunpack.c.l.b16 %v120
    %v625 = vunpack.c.h.b16 %v120
    %v626 = vunpack.c.l.b16 %v121
    %v627 = vunpack.c.h.b16 %v121
    %v628 = vunpack.c.l.b16 %v122
    %v629 = vunpack.c.h.b16 %v122
    %v630 = vunpack.c.l.b16 %v123
    %v631 = vunpack.c.h.b16 %v123
    %v632 = vunpack.c.l.b16 %v124
    %v633 = vunpack.c.h.b16 %v124
    %v634 = vunpack.c.l.b16 %v125
    %v635 = vunpack.c.h.b16 %v125
    %v636 = vunpack.c.l.b16 %v126
    %v637 = vunpack.c.h.b16 %v126
    %v638 = vunpack.c.l.b16 %v127
    %v639 = vunpack.c.h.b16 %v127
    %v640 = vunpack.c.l.b16 %v128
    %v641 = vunpack.c.h.b16 %v128
    %v642 = vunpack.c.l.b16 %v129
    %v643 = vunpack.c.h.b16 %v129
    %v644 = vunpack.c.l.b16 %v130
    %v645 = vunpack.c.h.b16 %v130
    %v646 = vunpack.c.l.b16 %v131
    %v647 = vunpack.c.h.b16 %v131
    %v648 = vunpack.c.l.b16 %v132
    %v649 = vunpack.c.h.b16 %v132
    %v650 = vunpack.c.l.b16 %v133
    %v651 = vunpack.c.h.b16 %v133
    %v652 = vunpack.c.l.b16 %v134
    %v653 = vunpack.c.h.b16 %v134
    %v654 = vunpack.c.l.b16 %v135
    %v655 = vunpack.c.h.b16 %v135
    %v656 = vunpack.c.l.b16 %v136
    %v657 = vunpack.c.h.b16 %v136
    %v658 = vunpack.c.l.b16 %v137
    %v659 = vunpack.c.h.b16 %v137
    %v660 = vunpack.c.l.b16 %v138
    %v661 = vunpack.c.h.b16 %v138
    %v662 = vunpack.c.l.b16 %v139
    %v663 = vunpack.c.h.b16 %v139
    %v664 = vunpack.c.l.b16 %v140
    %v665 = vunpack.c.h.b16 %v140
    %v666 = vunpack.c.l.b16 %v141
    %v667 = vunpack.c.h.b16 %v141
    %v668 = vunpack.c.l.b16 %v142
    %v669 = vunpack.c.h.b16 %v142
    %v670 = vunpack.c.l.b16 %v143
    %v671 = vunpack.c.h.b16 %v143
    %v672 = vunpack.c.l.b16 %v144
    %v673 = vunpack.c.h.b16 %v144
    %v674 = vunpack.c.l.b16 %v145
    %v675 = vunpack.c.h.b16 %v145
    %v676 = vunpack.c.l.b16 %v146
    %v677 = vunpack.c.h.b16 %v146
    %v678 = vunpack.c.l.b16 %v147
    %v679 = vunpack.c.h.b16 %v147
    %v680 = vunpack.c.l.b16 %v148
    %v681 = vunpack.c.h.b16 %v148
    %v682 = vunpack.c.l.b16 %v149
    %v683 = vunpack.c.h.b16 %v149
    %v684 = vunpack.c.l.b16 %v150
    %v685 = vunpack.c.h.b16 %v150
    %v686 = vunpack.c.l.b16 %v151
    %v687 = vunpack.c.h.b16 %v151
    %v688 = vunpack.c.l.b16 %v152
    %v689 = vunpack.c.h.b16 %v152
    %v690 = vunpack.c.l.b16 %v153
    %v691 = vunpack.c.h.b16 %v153
    %v692 = vunpack.c.l.b16 %v154
    %v693 = vunpack.c.h.b16 %v154
    %v694 = vunpack.c.l.b16 %v155
    %v695 = vunpack.c.h.b16 %v155
    %v696 = vunpack.c.l.b16 %v156
    %v697 = vunpack.c.h.b16 %v156
    %v698 = vunpack.c.l.b16 %v157
    %v699 = vunpack.c.h.b16 %v157
    %v700 = vunpack.c.l.b16 %v158
    %v701 = vunpack.c.h.b16 %v158
    %v702 = vunpack.c.l.b16 %v159
    %v703 = vunpack.c.h.b16 %v159
    %v704 = vunpack.c.l.b16 %v160
    %v705 = vunpack.c.h.b16 %v160
    %v706 = vunpack.c.l.b16 %v161
    %v707 = vunpack.c.h.b16 %v161
    %v708 = vunpack.c.l.b16 %v162
    %v709 = vunpack.c.h.b16 %v162
    %v710 = vunpack.c.l.b16 %v163
    %v711 = vunpack.c.h.b16 %v163
    %v712 = vunpack.c.l.b16 %v164
    %v713 = vunpack.c.h.b16 %v164
    %v714 = vunpack.c.l.b16 %v165
    %v715 = vunpack.c.h.b16 %v165
    %v716 = vunpack.c.l.b16 %v166
    %v717 = vunpack.c.h.b16 %v166
    %v718 = vunpack.c.l.b16 %v167
    %v719 = vunpack.c.h.b16 %v167
    %v720 = vunpack.c.l.b16 %v168
    %v721 = vunpack.c.h.b16 %v168
    %v722 = vunpack.c.l.b16 %v169
    %v723 = vunpack.c.h.b16 %v169
    %v724 = vunpack.c.l.b16 %v170
    %v725 = vunpack.c.h.b16 %v170
    %v726 = vunpack.c.l.b16 %v171
    %v727 = vunpack.c.h.b16 %v171
    %v728 = vunpack.c.l.b16 %v172
    %v729 = vunpack.c.h.b16 %v172
    %v730 = vunpack.c.l.b16 %v173
    %v731 = vunpack.c.h.b16 %v173
    %v732 = vunpack.c.l.b16 %v174
    %v733 = vunpack.c.h.b16 %v174
    %v734 = vunpack.c.l.b16 %v175
    %v735 = vunpack.c.h.b16 %v175
    %v736 = vunpack.c.l.b16 %v176
    %v737 = vunpack.c.h.b16 %v176
    %v738 = vunpack.c.l.b16 %v177
    %v739 = vunpack.c.h.b16 %v177
    %v740 = vunpack.c.l.b16 %v178
    %v741 = vunpack.c.h.b16 %v178
    %v742 = vunpack.c.l.b16 %v179
    %v743 = vunpack.c.h.b16 %v179
    %v744 = vunpack.c.l.b16 %v180
    %v745 = vunpack.c.h.b16 %v180
    %v746 = vunpack.c.l.b16 %v181
    %v747 = vunpack.c.h.b16 %v181
    %v748 = vunpack.c.l.b16 %v182
    %v749 = vunpack.c.h.b16 %v182
    %v750 = vunpack.c.l.b16 %v183
    %v751 = vunpack.c.h.b16 %v183
    %v752 = vunpack.c.l.b16 %v184
    %v753 = vunpack.c.h.b16 %v184
    %v754 = vunpack.c.l.b16 %v185
    %v755 = vunpack.c.h.b16 %v185
    %v756 = vunpack.c.l.b16 %v186
    %v757 = vunpack.c.h.b16 %v186
    %v758 = vunpack.c.l.b16 %v187
    %v759 = vunpack.c.h.b16 %v187
    %v760 = vunpack.c.l.b16 %v188
    %v761 = vunpack.c.h.b16 %v188
    %v762 = vunpack.c.l.b16 %v189
    %v763 = vunpack.c.h.b16 %v189
    %v764 = vunpack.c.l.b16 %v190
    %v765 = vunpack.c.h.b16 %v190
    %v766 = vunpack.c.l.b16 %v191
    %v767 = vunpack.c.h.b16 %v191
    %v768 = vunpack.c.l.b16 %v192
    %v769 = vunpack.c.h.b16 %v192
    %v770 = vunpack.c.l.b16 %v193
    %v771 = vunpack.c.h.b16 %v193
    %v772 = vunpack.c.l.b16 %v194
    %v773 = vunpack.c.h.b16 %v194
    %v774 = vunpack.c.l.b16 %v195
    %v775 = vunpack.c.h.b16 %v195
    %v776 = vunpack.c.l.b16 %v196
    %v777 = vunpack.c.h.b16 %v196
    %v778 = vunpack.c.l.b16 %v197
    %v779 = vunpack.c.h.b16 %v197
    %v780 = vunpack.c.l.b16 %v198
    %v781 = vunpack.c.h.b16 %v198
    %v782 = vunpack.c.l.b16 %v199
    %v783 = vunpack.c.h.b16 %v199
    %v784 = vunpack.c.l.b16 %v200
    %v785 = vunpack.c.h.b16 %v200
    %v786 = vunpack.c.l.b16 %v201
    %v787 = vunpack.c.h.b16 %v201
    %v788 = vunpack.c.l.b16 %v202
    %v789 = vunpack.c.h.b16 %v202
    %v790 = vunpack.c.l.b16 %v203
    %v791 = vunpack.c.h.b16 %v203
    %v792 = vunpack.c.l.b16 %v204
    %v793 = vunpack.c.h.b16 %v204
    %v794 = vunpack.c.l.b16 %v205
    %v795 = vunpack.c.h.b16 %v205
    %v796 = vunpack.c.l.b16 %v206
    %v797 = vunpack.c.h.b16 %v206
    %v798 = vunpack.c.l.b16 %v207
    %v799 = vunpack.c.h.b16 %v207
    %v800 = vunpack.c.l.b16 %v208
    %v801 = vunpack.c.h.b16 %v208
    %v802 = vunpack.c.l.b16 %v209
    %v803 = vunpack.c.h.b16 %v209
    %v804 = vunpack.c.l.b16 %v210
    %v805 = vunpack.c.h.b16 %v210
    %v806 = vunpack.c.l.b16 %v211
    %v807 = vunpack.c.h.b16 %v211
    %v808 = vunpack.c.l.b16 %v212
    %v809 = vunpack.c.h.b16 %v212
    %v810 = vunpack.c.l.b16 %v213
    %v811 = vunpack.c.h.b16 %v213
    %v812 = vunpack.c.l.b16 %v214
    %v813 = vunpack.c.h.b16 %v214
    %v814 = vunpack.c.l.b16 %v215
    %v815 = vunpack.c.h.b16 %v215
    %v816 = vunpack.c.l.b16 %v216
    %v817 = vunpack.c.h.b16 %v216
    %v818 = vunpack.c.l.b16 %v217
    %v819 = vunpack.c.h.b16 %v217
    %v820 = vunpack.c.l.b16 %v218
    %v821 = vunpack.c.h.b16 %v218
    %v822 = vunpack.c.l.b16 %v219
    %v823 = vunpack.c.h.b16 %v219
    %v824 = vunpack.c.l.b16 %v220
    %v825 = vunpack.c.h.b16 %v220
    %v826 = vunpack.c.l.b16 %v221
    %v827 = vunpack.c.h.b16 %v221
    %v828 = vunpack.c.l.b16 %v222
    %v829 = vunpack.c.h.b16 %v222
    %v830 = vunpack.c.l.b16 %v223
    %v831 = vunpack.c.h.b16 %v223
    %v832 = vunpack.c.l.b16 %v224
    %v833 = vunpack.c.h.b16 %v224
    %v834 = vunpack.c.l.b16 %v225
    %v835 = vunpack.c.h.b16 %v225
    %v836 = vunpack.c.l.b16 %v226
    %v837 = vunpack.c.h.b16 %v226
    %v838 = vunpack.c.l.b16 %v227
    %v839 = vunpack.c.h.b16 %v227
    %v840 = vunpack.c.l.b16 %v228
    %v841 = vunpack.c.h.b16 %v228
    %v842 = vunpack.c.l.b16 %v229
    %v843 = vunpack.c.h.b16 %v229
    %v844 = vunpack.c.l.b16 %v230
    %v845 = vunpack.c.h.b16 %v230
    %v846 = vunpack.c.l.b16 %v231
    %v847 = vunpack.c.h.b16 %v231
    %v848 = vunpack.c.l.b16 %v232
    %v849 = vunpack.c.h.b16 %v232
    %v850 = vunpack.c.l.b16 %v233
    %v851 = vunpack.c.h.b16 %v233
    %v852 = vunpack.c.l.b16 %v234
    %v853 = vunpack.c.h.b16 %v234
    %v854 = vunpack.c.l.b16 %v235
    %v855 = vunpack.c.h.b16 %v235
    %v856 = vunpack.c.l.b16 %v236
    %v857 = vunpack.c.h.b16 %v236
    %v858 = vunpack.c.l.b16 %v237
    %v859 = vunpack.c.h.b16 %v237
    %v860 = vunpack.c.l.b16 %v238
    %v861 = vunpack.c.h.b16 %v238
    %v862 = vunpack.c.l.b16 %v239
    %v863 = vunpack.c.h.b16 %v239
    %v864 = vunpack.c.l.b16 %v240
    %v865 = vunpack.c.h.b16 %v240
    %v866 = vunpack.c.l.b16 %v241
    %v867 = vunpack.c.h.b16 %v241
    %v868 = vunpack.c.l.b16 %v242
    %v869 = vunpack.c.h.b16 %v242
    %v870 = vunpack.c.l.b16 %v243
    %v871 = vunpack.c.h.b16 %v243
    %v872 = vunpack.c.l.b16 %v244
    %v873 = vunpack.c.h.b16 %v244
    %v874 = vunpack.c.l.b16 %v245
    %v875 = vunpack.c.h.b16 %v245
    %v876 = vunpack.c.l.b16 %v246
    %v877 = vunpack.c.h.b16 %v246
    %v878 = vunpack.c.l.b16 %v247
    %v879 = vunpack.c.h.b16 %v247
    %v880 = vunpack.c.l.b16 %v248
    %v881 = vunpack.c.h.b16 %v248
    %v882 = vunpack.c.l.b16 %v249
    %v883 = vunpack.c.h.b16 %v249
    %v884 = vpack.c.b16 %v496, %v492
    %v885 = vpack.c.b16 %v497, %v493
    %v886 = vpack.c.b16 %v498, %v494
    %v887 = vpack.c.b16 %v499, %v495
    %v888 = vpack.c.b16 %v504, %v500
    %v889 = vpack.c.b16 %v505, %v501
    %v890 = vpack.c.b16 %v506, %v502
    %v891 = vpack.c.b16 %v507, %v503
    %v892 = vpack.c.b16 %v512, %v508
    %v893 = vpack.c.b16 %v513, %v509
    %v894 = vpack.c.b16 %v514, %v510
    %v895 = vpack.c.b16 %v515, %v511
    %v896 = vpack.c.b16 %v520, %v516
    %v897 = vpack.c.b16 %v521, %v517
    %v898 = vpack.c.b16 %v522, %v518
    %v899 = vpack.c.b16 %v523, %v519
    %v900 = vpack.c.b16 %v528, %v524
    %v901 = vpack.c.b16 %v529, %v525
    %v902 = vpack.c.b16 %v530, %v526
    %v903 = vpack.c.b16 %v531, %v527
    %v904 = vpack.c.b16 %v536, %v532
    %v905 = vpack.c.b16 %v537, %v533
    %v906 = vpack.c.b16 %v538, %v534
    %v907 = vpack.c.b16 %v539, %v535
    %v908 = vpack.c.b16 %v544, %v540
    %v909 = vpack.c.b16 %v545, %v541
    %v910 = vpack.c.b16 %v546, %v542
    %v911 = vpack.c.b16 %v547, %v543
    %v912 = vpack.c.b16 %v552, %v548
    %v913 = vpack.c.b16 %v553, %v549
    %v914 = vpack.c.b16 %v554, %v550
    %v915 = vpack.c.b16 %v555, %v551
    %v916 = vpack.c.b16 %v560, %v556
    %v917 = vpack.c.b16 %v561, %v557
    %v918 = vpack.c.b16 %v562, %v558
    %v919 = vpack.c.b16 %v563, %v559
    %v920 = vpack.c.b16 %v568, %v564
    %v921 = vpack.c.b16 %v569, %v565
    %v922 = vpack.c.b16 %v570, %v566
    %v923 = vpack.c.b16 %v571, %v567
    %v924 = vpack.c.b16 %v576, %v572
    %v925 = vpack.c.b16 %v577, %v573
    %v926 = vpack.c.b16 %v578, %v574
    %v927 = vpack.c.b16 %v579, %v575
    %v928 = vpack.c.b16 %v584, %v580
    %v929 = vpack.c.b16 %v585, %v581
    %v930 = vpack.c.b16 %v586, %v582
    %v931 = vpack.c.b16 %v587, %v583
    %v932 = vpack.c.b16 %v592, %v588
    %v933 = vpack.c.b16 %v593, %v589
    %v934 = vpack.c.b16 %v594, %v590
    %v935 = vpack.c.b16 %v595, %v591
    %v936 = vpack.c.b16 %v600, %v596
    %v937 = vpack.c.b16 %v601, %v597
    %v938 = vpack.c.b16 %v602, %v598
    %v939 = vpack.c.b16 %v603, %v599
    %v940 = vpack.c.b16 %v608, %v604
    %v941 = vpack.c.b16 %v609, %v605
    %v942 = vpack.c.b16 %v610, %v606
    %v943 = vpack.c.b16 %v611, %v607
    %v944 = vpack.c.b16 %v616, %v612
    %v945 = vpack.c.b16 %v617, %v613
    %v946 = vpack.c.b16 %v618, %v614
    %v947 = vpack.c.b16 %v619, %v615
    %v948 = vpack.c.b16 %v624, %v620
    %v949 = vpack.c.b16 %v625, %v621
    %v950 = vpack.c.b16 %v626, %v622
    %v951 = vpack.c.b16 %v627, %v623
    %v952 = vpack.c.b16 %v632, %v628
    %v953 = vpack.c.b16 %v633, %v629
    %v954 = vpack.c.b16 %v634, %v630
    %v955 = vpack.c.b16 %v635, %v631
    %v956 = vpack.c.b16 %v640, %v636
    %v957 = vpack.c.b16 %v641, %v637
    %v958 = vpack.c.b16 %v642, %v638
    %v959 = vpack.c.b16 %v643, %v639
    %v960 = vpack.c.b16 %v648, %v644
    %v961 = vpack.c.b16 %v649, %v645
    %v962 = vpack.c.b16 %v650, %v646
    %v963 = vpack.c.b16 %v651, %v647
    %v964 = vpack.c.b16 %v656, %v652
    %v965 = vpack.c.b16 %v657, %v653
    %v966 = vpack.c.b16 %v658, %v654
    %v967 = vpack.c.b16 %v659, %v655
    %v968 = vpack.c.b16 %v664, %v660
    %v969 = vpack.c.b16 %v665, %v661
    %v970 = vpack.c.b16 %v666, %v662
    %v971 = vpack.c.b16 %v667, %v663
    %v972 = vpack.c.b16 %v672, %v668
    %v973 = vpack.c.b16 %v673, %v669
    %v974 = vpack.c.b16 %v674, %v670
    %v975 = vpack.c.b16 %v675, %v671
    %v976 = vpack.c.b16 %v680, %v676
    %v977 = vpack.c.b16 %v681, %v677
    %v978 = vpack.c.b16 %v682, %v678
    %v979 = vpack.c.b16 %v683, %v679
    %v980 = vpack.c.b16 %v688, %v684
    %v981 = vpack.c.b16 %v689, %v685
    %v982 = vpack.c.b16 %v690, %v686
    %v983 = vpack.c.b16 %v691, %v687
    %v984 = vpack.c.b16 %v696, %v692
    %v985 = vpack.c.b16 %v697, %v693
    %v986 = vpack.c.b16 %v698, %v694
    %v987 = vpack.c.b16 %v699, %v695
    %v988 = vpack.c.b16 %v704, %v700
    %v989 = vpack.c.b16 %v705, %v701
    %v990 = vpack.c.b16 %v706, %v702
    %v991 = vpack.c.b16 %v707, %v703
    %v992 = vpack.c.b16 %v712, %v708
    %v993 = vpack.c.b16 %v713, %v709
    %v994 = vpack.c.b16 %v714, %v710
    %v995 = vpack.c.b16 %v715, %v711
    %v996 = vpack.c.b16 %v720, %v716
    %v997 = vpack.c.b16 %v721, %v717
    %v998 = vpack.c.b16 %v722, %v718
    %v999 = vpack.c.b16 %v723, %v719
    %v1000 = vpack.c.b16 %v728, %v724
    %v1001 = vpack.c.b16 %v729, %v725
    %v1002 = vpack.c.b16 %v730, %v726
    %v1003 = vpack.c.b16 %v731, %v727
    %v1004 = vpack.c.b16 %v736, %v732
    %v1005 = vpack.c.b16 %v737, %v733
    %v1006 = vpack.c.b16 %v738, %v734
    %v1007 = vpack.c.b16 %v739, %v735
    %v1008 = vpack.c.b16 %v744, %v740
    %v1009 = vpack.c.b16 %v745, %v741
    %v1010 = vpack.c.b16 %v746, %v742
    %v1011 = vpack.c.b16 %v747, %v743
    %v1012 = vpack.c.b16 %v752, %v748
    %v1013 = vpack.c.b16 %v753, %v749
    %v1014 = vpack.c.b16 %v754, %v750
    %v1015 = vpack.c.b16 %v755, %v751
    %v1016 = vpack.c.b16 %v760, %v756
    %v1017 = vpack.c.b16 %v761, %v757
    %v1018 = vpack.c.b16 %v762, %v758
    %v1019 = vpack.c.b16 %v763, %v759
    %v1020 = vpack.c.b16 %v768, %v764
    %v1021 = vpack.c.b16 %v769, %v765
    %v1022 = vpack.c.b16 %v770, %v766
    %v1023 = vpack.c.b16 %v771, %v767
    %v1024 = vpack.c.b16 %v776, %v772
    %v1025 = vpack.c.b16 %v777, %v773
    %v1026 = vpack.c.b16 %v778, %v774
    %v1027 = vpack.c.b16 %v779, %v775
    %v1028 = vpack.c.b16 %v784, %v780
    %v1029 = vpack.c.b16 %v785, %v781
    %v1030 = vpack.c.b16 %v786, %v782
    %v1031 = vpack.c.b16 %v787, %v783
    %v1032 = vpack.c.b16 %v792, %v788
    %v1033 = vpack.c.b16 %v793, %v789
    %v1034 = vpack.c.b16 %v794, %v790
    %v1035 = vpack.c.b16 %v795, %v791
    %v1036 = vpack.c.b16 %v800, %v796
    %v1037 = vpack.c.b16 %v801, %v797
    %v1038 = vpack.c.b16 %v802, %v798
    %v1039 = vpack.c.b16 %v803, %v799
    %v1040 = vpack.c.b16 %v808, %v804
    %v1041 = vpack.c.b16 %v809, %v805
    %v1042 = vpack.c.b16 %v810, %v806
    %v1043 = vpack.c.b16 %v811, %v807
    %v1044 = vpack.c.b16 %v816, %v812
    %v1045 = vpack.c.b16 %v817, %v813
    %v1046 = vpack.c.b16 %v818, %v814
    %v1047 = vpack.c.b16 %v819, %v815
    %v1048 = vpack.c.b16 %v824, %v820
    %v1049 = vpack.c.b16 %v825, %v821
    %v1050 = vpack.c.b16 %v826, %v822
    %v1051 = vpack.c.b16 %v827, %v823
    %v1052 = vpack.c.b16 %v832, %v828
    %v1053 = vpack.c.b16 %v833, %v829
    %v1054 = vpack.c.b16 %v834, %v830
    %v1055 = vpack.c.b16 %v835, %v831
    %v1056 = vpack.c.b16 %v840, %v836
    %v1057 = vpack.c.b16 %v841, %v837
    %v1058 = vpack.c.b16 %v842, %v838
    %v1059 = vpack.c.b16 %v843, %v839
    %v1060 = vpack.c.b16 %v848, %v844
    %v1061 = vpack.c.b16 %v849, %v845
    %v1062 = vpack.c.b16 %v850, %v846
    %v1063 = vpack.c.b16 %v851, %v847
    %v1064 = vpack.c.b16 %v856, %v852
    %v1065 = vpack.c.b16 %v857, %v853
    %v1066 = vpack.c.b16 %v858, %v854
    %v1067 = vpack.c.b16 %v859, %v855
    %v1068 = vpack.c.b16 %v864, %v860
    %v1069 = vpack.c.b16 %v865, %v861
    %v1070 = vpack.c.b16 %v866, %v862
    %v1071 = vpack.c.b16 %v867, %v863
    %v1072 = vpack.c.b16 %v872, %v868
    %v1073 = vpack.c.b16 %v873, %v869
    %v1074 = vpack.c.b16 %v874, %v870
    %v1075 = vpack.c.b16 %v875, %v871
    %v1076 = vpack.c.b16 %v880, %v876
    %v1077 = vpack.c.b16 %v881, %v877
    %v1078 = vpack.c.b16 %v882, %v878
    %v1079 = vpack.c.b16 %v883, %v879
    %vm1276 = vcmask 130048
    %v1278 = vsel %vm1276, %v289, 0
    %1280 = vmatprep.subr.bf16.mxu0 %v913
    %1281 = vmatpush1.bf16.msra.mxu0 %v912
    %1282 = vmatprep.subr.bf16.mxu0 %v909
    %1283 = vmatpush1.bf16.msra.mxu0 %v908
    %1284 = vmatprep.subr.bf16.mxu0 %v905
    %1285 = vmatpush1.bf16.msra.mxu0 %v904
    %1286 = vmatprep.subr.bf16.mxu0 %v901
    %1287 = vmatpush1.bf16.msra.mxu0 %v900
    %1288 = vmatprep.subr.bf16.mxu0 %v897
    %1289 = vmatpush1.bf16.msra.mxu0 %v896
    %1290 = vmatprep.subr.bf16.mxu0 %v893
    %1291 = vmatpush1.bf16.msra.mxu0 %v892
    %1292 = vmatprep.subr.bf16.mxu0 %v889
    %1293 = vmatpush1.bf16.msra.mxu0 %v888
    %1294 = vmatprep.subr.bf16.mxu0 %v885
    %1295 = vmatpush1.bf16.msra.mxu0 %v884
    %1296 = vmatprep.subr.bf16.mxu0 %v945
    %1297 = vmatpush2.bf16.msra.mxu0 %v944
    %1298 = vmatprep.subr.bf16.mxu0 %v941
    %1299 = vmatpush2.bf16.msra.mxu0 %v940
    %1300 = vmatprep.subr.bf16.mxu0 %v937
    %1301 = vmatpush2.bf16.msra.mxu0 %v936
    %1302 = vmatprep.subr.bf16.mxu0 %v933
    %1303 = vmatpush2.bf16.msra.mxu0 %v932
    %1304 = vmatprep.subr.bf16.mxu0 %v929
    %1305 = vmatpush2.bf16.msra.mxu0 %v928
    %1306 = vmatprep.subr.bf16.mxu0 %v925
    %1307 = vmatpush2.bf16.msra.mxu0 %v924
    %1308 = vmatprep.subr.bf16.mxu0 %v921
    %1309 = vmatpush2.bf16.msra.mxu0 %v920
    %1310 = vmatprep.subr.bf16.mxu0 %v917
    %1311 = vmatpush2.bf16.msra.mxu0 %v916
    %1312 = vmatprep.mubr.bf16.mxu0 %v284
    %1313 = vmatmul.mubr.bf16.gmra.mxu0 %v283
    %v1314 = vpop.f32.mrf.mxu0
    %v1315 = vadd.f32 %v255, %v1314
    %v1316 = vpop.f32.mrf.mxu0
    %v1317 = vadd.f32 %v259, %v1316
    %v1318 = vpop.f32.mrf.mxu0
    %v1319 = vpop.f32.mrf.mxu0
    %1320 = vdwg.mxu0
    %1321 = vmatprep.subr.bf16.mxu0 %v977
    %1322 = vmatpush1.bf16.msra.mxu0 %v976
    %1323 = vmatprep.subr.bf16.mxu0 %v973
    %1324 = vmatpush1.bf16.msra.mxu0 %v972
    %1325 = vmatprep.subr.bf16.mxu0 %v969
    %1326 = vmatpush1.bf16.msra.mxu0 %v968
    %1327 = vmatprep.subr.bf16.mxu0 %v965
    %1328 = vmatpush1.bf16.msra.mxu0 %v964
    %1329 = vmatprep.subr.bf16.mxu0 %v961
    %1330 = vmatpush1.bf16.msra.mxu0 %v960
    %1331 = vmatprep.subr.bf16.mxu0 %v957
    %1332 = vmatpush1.bf16.msra.mxu0 %v956
    %1333 = vmatprep.subr.bf16.mxu0 %v953
    %1334 = vmatpush1.bf16.msra.mxu0 %v952
    %1335 = vmatprep.subr.bf16.mxu0 %v949
    %1336 = vmatpush1.bf16.msra.mxu0 %v948
    %1337 = vmatprep.subr.bf16.mxu0 %v1009
    %1338 = vmatpush2.bf16.msra.mxu0 %v1008
    %1339 = vmatprep.subr.bf16.mxu0 %v1005
    %1340 = vmatpush2.bf16.msra.mxu0 %v1004
    %1341 = vmatprep.subr.bf16.mxu0 %v1001
    %1342 = vmatpush2.bf16.msra.mxu0 %v1000
    %1343 = vmatprep.subr.bf16.mxu0 %v997
    %1344 = vmatpush2.bf16.msra.mxu0 %v996
    %1345 = vmatprep.subr.bf16.mxu0 %v993
    %1346 = vmatpush2.bf16.msra.mxu0 %v992
    %1347 = vmatprep.subr.bf16.mxu0 %v989
    %1348 = vmatpush2.bf16.msra.mxu0 %v988
    %1349 = vmatprep.subr.bf16.mxu0 %v985
    %1350 = vmatpush2.bf16.msra.mxu0 %v984
    %1351 = vmatprep.subr.bf16.mxu0 %v981
    %1352 = vmatpush2.bf16.msra.mxu0 %v980
    %1353 = vmatprep.mubr.bf16.mxu0 %v286
    %1354 = vmatmul.mubr.bf16.gmra.mxu0 %v285
    %v1355 = vpop.f32.mrf.mxu0
    %v1356 = vadd.f32 %v1315, %v1355
    %v1357 = vpop.f32.mrf.mxu0
    %v1358 = vadd.f32 %v1317, %v1357
    %v1359 = vpop.f32.mrf.mxu0
    %v1360 = vpop.f32.mrf.mxu0
    %1361 = vdwg.mxu0
    %1362 = vmatprep.subr.bf16.mxu0 %v1041
    %1363 = vmatpush1.bf16.msra.mxu0 %v1040
    %1364 = vmatprep.subr.bf16.mxu0 %v1037
    %1365 = vmatpush1.bf16.msra.mxu0 %v1036
    %1366 = vmatprep.subr.bf16.mxu0 %v1033
    %1367 = vmatpush1.bf16.msra.mxu0 %v1032
    %1368 = vmatprep.subr.bf16.mxu0 %v1029
    %1369 = vmatpush1.bf16.msra.mxu0 %v1028
    %1370 = vmatprep.subr.bf16.mxu0 %v1025
    %1371 = vmatpush1.bf16.msra.mxu0 %v1024
    %1372 = vmatprep.subr.bf16.mxu0 %v1021
    %1373 = vmatpush1.bf16.msra.mxu0 %v1020
    %1374 = vmatprep.subr.bf16.mxu0 %v1017
    %1375 = vmatpush1.bf16.msra.mxu0 %v1016
    %1376 = vmatprep.subr.bf16.mxu0 %v1013
    %1377 = vmatpush1.bf16.msra.mxu0 %v1012
    %1378 = vmatprep.subr.bf16.mxu0 %v1073
    %1379 = vmatpush2.bf16.msra.mxu0 %v1072
    %1380 = vmatprep.subr.bf16.mxu0 %v1069
    %1381 = vmatpush2.bf16.msra.mxu0 %v1068
    %1382 = vmatprep.subr.bf16.mxu0 %v1065
    %1383 = vmatpush2.bf16.msra.mxu0 %v1064
    %1384 = vmatprep.subr.bf16.mxu0 %v1061
    %1385 = vmatpush2.bf16.msra.mxu0 %v1060
    %1386 = vmatprep.subr.bf16.mxu0 %v1057
    %1387 = vmatpush2.bf16.msra.mxu0 %v1056
    %1388 = vmatprep.subr.bf16.mxu0 %v1053
    %1389 = vmatpush2.bf16.msra.mxu0 %v1052
    %1390 = vmatprep.subr.bf16.mxu0 %v1049
    %1391 = vmatpush2.bf16.msra.mxu0 %v1048
    %1392 = vmatprep.subr.bf16.mxu0 %v1045
    %1393 = vmatpush2.bf16.msra.mxu0 %v1044
    %1394 = vmatprep.mubr.bf16.mxu0 %v288
    %1395 = vmatmul.mubr.bf16.gmra.mxu0 %v287
    %v1396 = vpop.f32.mrf.mxu0
    %v1397 = vadd.f32 %v1356, %v1396
    %v1398 = vpop.f32.mrf.mxu0
    %v1399 = vadd.f32 %v1358, %v1398
    %v1400 = vpop.f32.mrf.mxu0
    %v1401 = vpop.f32.mrf.mxu0
    %1402 = vdwg.mxu0
    %1403 = vmatprep.subr.bf16.mxu0 0
    %1404 = vmatpush1.bf16.msra.mxu0 0
    %1405 = vmatprep.subr.bf16.mxu0 0
    %1406 = vmatpush1.bf16.msra.mxu0 0
    %1407 = vmatprep.subr.bf16.mxu0 0
    %1408 = vmatpush1.bf16.msra.mxu0 0
    %1409 = vmatprep.subr.bf16.mxu0 0
    %1410 = vmatpush1.bf16.msra.mxu0 0
    %1411 = vmatprep.subr.bf16.mxu0 0
    %1412 = vmatpush1.bf16.msra.mxu0 0
    %1413 = vmatprep.subr.bf16.mxu0 0
    %1414 = vmatpush1.bf16.msra.mxu0 0
    %1415 = vmatprep.subr.bf16.mxu0 0
    %1416 = vmatpush1.bf16.msra.mxu0 0
    %1417 = vmatprep.subr.bf16.mxu0 %v1077
    %1418 = vmatpush1.bf16.msra.mxu0 %v1076
    %1419 = vmatprep.subr.bf16.mxu0 0
    %1420 = vmatpush2.bf16.msra.mxu0 0
    %1421 = vmatprep.subr.bf16.mxu0 0
    %1422 = vmatpush2.bf16.msra.mxu0 0
    %1423 = vmatprep.subr.bf16.mxu0 0
    %1424 = vmatpush2.bf16.msra.mxu0 0
    %1425 = vmatprep.subr.bf16.mxu0 0
    %1426 = vmatpush2.bf16.msra.mxu0 0
    %1427 = vmatprep.subr.bf16.mxu0 0
    %1428 = vmatpush2.bf16.msra.mxu0 0
    %1429 = vmatprep.subr.bf16.mxu0 0
    %1430 = vmatpush2.bf16.msra.mxu0 0
    %1431 = vmatprep.subr.bf16.mxu0 0
    %1432 = vmatpush2.bf16.msra.mxu0 0
    %1433 = vmatprep.subr.bf16.mxu0 0
    %1434 = vmatpush2.bf16.msra.mxu0 0
    %1435 = vmatprep.mubr.bf16.mxu0 0
    %1436 = vmatmul.mubr.bf16.gmra.mxu0 %v1278
    %v1437 = vpop.f32.mrf.mxu0
    %v1438 = vadd.f32 %v1397, %v1437
    %v1439 = vpop.f32.mrf.mxu0
    %v1440 = vadd.f32 %v1399, %v1439
    %v1441 = vpop.f32.mrf.mxu0
    %v1442 = vpop.f32.mrf.mxu0
    %1443 = vdwg.mxu0
    %1444 = vmatprep.subr.bf16.mxu0 %v915
    %1445 = vmatpush1.bf16.msra.mxu0 %v914
    %1446 = vmatprep.subr.bf16.mxu0 %v911
    %1447 = vmatpush1.bf16.msra.mxu0 %v910
    %1448 = vmatprep.subr.bf16.mxu0 %v907
    %1449 = vmatpush1.bf16.msra.mxu0 %v906
    %1450 = vmatprep.subr.bf16.mxu0 %v903
    %1451 = vmatpush1.bf16.msra.mxu0 %v902
    %1452 = vmatprep.subr.bf16.mxu0 %v899
    %1453 = vmatpush1.bf16.msra.mxu0 %v898
    %1454 = vmatprep.subr.bf16.mxu0 %v895
    %1455 = vmatpush1.bf16.msra.mxu0 %v894
    %1456 = vmatprep.subr.bf16.mxu0 %v891
    %1457 = vmatpush1.bf16.msra.mxu0 %v890
    %1458 = vmatprep.subr.bf16.mxu0 %v887
    %1459 = vmatpush1.bf16.msra.mxu0 %v886
    %1460 = vmatprep.subr.bf16.mxu0 %v947
    %1461 = vmatpush2.bf16.msra.mxu0 %v946
    %1462 = vmatprep.subr.bf16.mxu0 %v943
    %1463 = vmatpush2.bf16.msra.mxu0 %v942
    %1464 = vmatprep.subr.bf16.mxu0 %v939
    %1465 = vmatpush2.bf16.msra.mxu0 %v938
    %1466 = vmatprep.subr.bf16.mxu0 %v935
    %1467 = vmatpush2.bf16.msra.mxu0 %v934
    %1468 = vmatprep.subr.bf16.mxu0 %v931
    %1469 = vmatpush2.bf16.msra.mxu0 %v930
    %1470 = vmatprep.subr.bf16.mxu0 %v927
    %1471 = vmatpush2.bf16.msra.mxu0 %v926
    %1472 = vmatprep.subr.bf16.mxu0 %v923
    %1473 = vmatpush2.bf16.msra.mxu0 %v922
    %1474 = vmatprep.subr.bf16.mxu0 %v919
    %1475 = vmatpush2.bf16.msra.mxu0 %v918
    %1476 = vmatprep.mubr.bf16.mxu0 %v284
    %1477 = vmatmul.mubr.bf16.gmra.mxu0 %v283
    %v1478 = vpop.f32.mrf.mxu0
    %v1479 = vadd.f32 %v263, %v1478
    %v1480 = vpop.f32.mrf.mxu0
    %v1481 = vadd.f32 %v267, %v1480
    %v1482 = vpop.f32.mrf.mxu0
    %v1483 = vpop.f32.mrf.mxu0
    %1484 = vdwg.mxu0
    %1485 = vmatprep.subr.bf16.mxu0 %v979
    %1486 = vmatpush1.bf16.msra.mxu0 %v978
    %1487 = vmatprep.subr.bf16.mxu0 %v975
    %1488 = vmatpush1.bf16.msra.mxu0 %v974
    %1489 = vmatprep.subr.bf16.mxu0 %v971
    %1490 = vmatpush1.bf16.msra.mxu0 %v970
    %1491 = vmatprep.subr.bf16.mxu0 %v967
    %1492 = vmatpush1.bf16.msra.mxu0 %v966
    %1493 = vmatprep.subr.bf16.mxu0 %v963
    %1494 = vmatpush1.bf16.msra.mxu0 %v962
    %1495 = vmatprep.subr.bf16.mxu0 %v959
    %1496 = vmatpush1.bf16.msra.mxu0 %v958
    %1497 = vmatprep.subr.bf16.mxu0 %v955
    %1498 = vmatpush1.bf16.msra.mxu0 %v954
    %1499 = vmatprep.subr.bf16.mxu0 %v951
    %1500 = vmatpush1.bf16.msra.mxu0 %v950
    %1501 = vmatprep.subr.bf16.mxu0 %v1011
    %1502 = vmatpush2.bf16.msra.mxu0 %v1010
    %1503 = vmatprep.subr.bf16.mxu0 %v1007
    %1504 = vmatpush2.bf16.msra.mxu0 %v1006
    %1505 = vmatprep.subr.bf16.mxu0 %v1003
    %1506 = vmatpush2.bf16.msra.mxu0 %v1002
    %1507 = vmatprep.subr.bf16.mxu0 %v999
    %1508 = vmatpush2.bf16.msra.mxu0 %v998
    %1509 = vmatprep.subr.bf16.mxu0 %v995
    %1510 = vmatpush2.bf16.msra.mxu0 %v994
    %1511 = vmatprep.subr.bf16.mxu0 %v991
    %1512 = vmatpush2.bf16.msra.mxu0 %v990
    %1513 = vmatprep.subr.bf16.mxu0 %v987
    %1514 = vmatpush2.bf16.msra.mxu0 %v986
    %1515 = vmatprep.subr.bf16.mxu0 %v983
    %1516 = vmatpush2.bf16.msra.mxu0 %v982
    %1517 = vmatprep.mubr.bf16.mxu0 %v286
    %1518 = vmatmul.mubr.bf16.gmra.mxu0 %v285
    %v1519 = vpop.f32.mrf.mxu0
    %v1520 = vadd.f32 %v1479, %v1519
    %v1521 = vpop.f32.mrf.mxu0
    %v1522 = vadd.f32 %v1481, %v1521
    %v1523 = vpop.f32.mrf.mxu0
    %v1524 = vpop.f32.mrf.mxu0
    %1525 = vdwg.mxu0
    %1526 = vmatprep.subr.bf16.mxu0 %v1043
    %1527 = vmatpush1.bf16.msra.mxu0 %v1042
    %1528 = vmatprep.subr.bf16.mxu0 %v1039
    %1529 = vmatpush1.bf16.msra.mxu0 %v1038
    %1530 = vmatprep.subr.bf16.mxu0 %v1035
    %1531 = vmatpush1.bf16.msra.mxu0 %v1034
    %1532 = vmatprep.subr.bf16.mxu0 %v1031
    %1533 = vmatpush1.bf16.msra.mxu0 %v1030
    %1534 = vmatprep.subr.bf16.mxu0 %v1027
    %1535 = vmatpush1.bf16.msra.mxu0 %v1026
    %1536 = vmatprep.subr.bf16.mxu0 %v1023
    %1537 = vmatpush1.bf16.msra.mxu0 %v1022
    %1538 = vmatprep.subr.bf16.mxu0 %v1019
    %1539 = vmatpush1.bf16.msra.mxu0 %v1018
    %1540 = vmatprep.subr.bf16.mxu0 %v1015
    %1541 = vmatpush1.bf16.msra.mxu0 %v1014
    %1542 = vmatprep.subr.bf16.mxu0 %v1075
    %1543 = vmatpush2.bf16.msra.mxu0 %v1074
    %1544 = vmatprep.subr.bf16.mxu0 %v1071
    %1545 = vmatpush2.bf16.msra.mxu0 %v1070
    %1546 = vmatprep.subr.bf16.mxu0 %v1067
    %1547 = vmatpush2.bf16.msra.mxu0 %v1066
    %1548 = vmatprep.subr.bf16.mxu0 %v1063
    %1549 = vmatpush2.bf16.msra.mxu0 %v1062
    %1550 = vmatprep.subr.bf16.mxu0 %v1059
    %1551 = vmatpush2.bf16.msra.mxu0 %v1058
    %1552 = vmatprep.subr.bf16.mxu0 %v1055
    %1553 = vmatpush2.bf16.msra.mxu0 %v1054
    %1554 = vmatprep.subr.bf16.mxu0 %v1051
    %1555 = vmatpush2.bf16.msra.mxu0 %v1050
    %1556 = vmatprep.subr.bf16.mxu0 %v1047
    %1557 = vmatpush2.bf16.msra.mxu0 %v1046
    %1558 = vmatprep.mubr.bf16.mxu0 %v288
    %1559 = vmatmul.mubr.bf16.gmra.mxu0 %v287
    %v1560 = vpop.f32.mrf.mxu0
    %v1561 = vadd.f32 %v1520, %v1560
    %v1562 = vpop.f32.mrf.mxu0
    %v1563 = vadd.f32 %v1522, %v1562
    %v1564 = vpop.f32.mrf.mxu0
    %v1565 = vpop.f32.mrf.mxu0
    %1566 = vdwg.mxu0
    %1567 = vmatprep.subr.bf16.mxu0 0
    %1568 = vmatpush1.bf16.msra.mxu0 0
    %1569 = vmatprep.subr.bf16.mxu0 0
    %1570 = vmatpush1.bf16.msra.mxu0 0
    %1571 = vmatprep.subr.bf16.mxu0 0
    %1572 = vmatpush1.bf16.msra.mxu0 0
    %1573 = vmatprep.subr.bf16.mxu0 0
    %1574 = vmatpush1.bf16.msra.mxu0 0
    %1575 = vmatprep.subr.bf16.mxu0 0
    %1576 = vmatpush1.bf16.msra.mxu0 0
    %1577 = vmatprep.subr.bf16.mxu0 0
    %1578 = vmatpush1.bf16.msra.mxu0 0
    %1579 = vmatprep.subr.bf16.mxu0 0
    %1580 = vmatpush1.bf16.msra.mxu0 0
    %1581 = vmatprep.subr.bf16.mxu0 %v1079
    %1582 = vmatpush1.bf16.msra.mxu0 %v1078
    %1583 = vmatprep.subr.bf16.mxu0 0
    %1584 = vmatpush2.bf16.msra.mxu0 0
    %1585 = vmatprep.subr.bf16.mxu0 0
    %1586 = vmatpush2.bf16.msra.mxu0 0
    %1587 = vmatprep.subr.bf16.mxu0 0
    %1588 = vmatpush2.bf16.msra.mxu0 0
    %1589 = vmatprep.subr.bf16.mxu0 0
    %1590 = vmatpush2.bf16.msra.mxu0 0
    %1591 = vmatprep.subr.bf16.mxu0 0
    %1592 = vmatpush2.bf16.msra.mxu0 0
    %1593 = vmatprep.subr.bf16.mxu0 0
    %1594 = vmatpush2.bf16.msra.mxu0 0
    %1595 = vmatprep.subr.bf16.mxu0 0
    %1596 = vmatpush2.bf16.msra.mxu0 0
    %1597 = vmatprep.subr.bf16.mxu0 0
    %1598 = vmatpush2.bf16.msra.mxu0 0
    %1599 = vmatprep.mubr.bf16.mxu0 0
    %1600 = vmatmul.mubr.bf16.gmra.mxu0 %v1278
    %v1601 = vpop.f32.mrf.mxu0
    %v1602 = vadd.f32 %v1561, %v1601
    %v1603 = vpop.f32.mrf.mxu0
    %v1604 = vadd.f32 %v1563, %v1603
    %v1605 = vpop.f32.mrf.mxu0
    %v1606 = vpop.f32.mrf.mxu0
    %1607 = vdwg.mxu0
    %v1608 = vmax.f32 %v1438, 0.0
    %v1609 = vmax.f32 %v1440, 0.0
    %v1610 = vmax.f32 %v1602, 0.0
    %v1611 = vmax.f32 %v1604, 0.0
    %v1612 = vpack.c.bf16 %v1608, %v1608
    %v1613 = vpack.c.bf16 %v1609, %v1609
    %v1614 = vpack.c.bf16 %v1610, %v1610
    %v1615 = vpack.c.bf16 %v1611, %v1611
    %v1616 = vld [vmem:[#allocation5] sm:$0xf]
    %v1617 = vld [vmem:[#allocation5 + $0x4] sm:$0xf]
    %v1618 = vld [vmem:[#allocation5 + $0x8] sm:$0xf]
    %v1619 = vld [vmem:[#allocation5 + $0xc] sm:$0xf]
    %v1620 = vld [vmem:[#allocation5 + $0x10] sm:$0xf]
    %v1621 = vld [vmem:[#allocation5 + $0x14] sm:$0xf]
    %v1622 = vld [vmem:[#allocation5 + $0x18] sm:$0xf]
    %v1623 = vld [vmem:[#allocation5 + $0x1c] sm:$0xf]
    %v1624 = vld [vmem:[#allocation5 + $0x20] sm:$0xf]
    %v1625 = vld [vmem:[#allocation5 + $0x24] sm:$0xf]
    %v1626 = vld [vmem:[#allocation5 + $0x28] sm:$0xf]
    %v1627 = vld [vmem:[#allocation5 + $0x2c] sm:$0xf]
    %v1628 = vld [vmem:[#allocation5 + $0x30] sm:$0xf]
    %v1629 = vld [vmem:[#allocation5 + $0x34] sm:$0xf]
    %v1630 = vld [vmem:[#allocation5 + $0x38] sm:$0xf]
    %v1631 = vld [vmem:[#allocation5 + $0x3c] sm:$0xf]
    %v1632 = vld [vmem:[#allocation5 + $0x40] sm:$0xf]
    %v1633 = vld [vmem:[#allocation5 + $0x44] sm:$0xf]
    %v1634 = vld [vmem:[#allocation5 + $0x48] sm:$0xf]
    %v1635 = vld [vmem:[#allocation5 + $0x4c] sm:$0xf]
    %v1636 = vld [vmem:[#allocation5 + $0x50] sm:$0xf]
    %v1637 = vld [vmem:[#allocation5 + $0x54] sm:$0xf]
    %v1638 = vld [vmem:[#allocation5 + $0x58] sm:$0xf]
    %v1639 = vld [vmem:[#allocation5 + $0x5c] sm:$0xf]
    %v1640 = vld [vmem:[#allocation5 + $0x60] sm:$0xf]
    %v1641 = vld [vmem:[#allocation5 + $0x64] sm:$0xf]
    %v1642 = vld [vmem:[#allocation5 + $0x68] sm:$0xf]
    %v1643 = vld [vmem:[#allocation5 + $0x6c] sm:$0xf]
    %v1644 = vld [vmem:[#allocation5 + $0x70] sm:$0xf]
    %v1645 = vld [vmem:[#allocation5 + $0x74] sm:$0xf]
    %v1646 = vld [vmem:[#allocation5 + $0x78] sm:$0xf]
    %v1647 = vld [vmem:[#allocation5 + $0x7c] sm:$0xf]
    %v1648 = vld [vmem:[#allocation5 + $0x80] sm:$0xf]
    %v1649 = vld [vmem:[#allocation5 + $0x84] sm:$0xf]
    %v1650 = vld [vmem:[#allocation5 + $0x88] sm:$0xf]
    %v1651 = vld [vmem:[#allocation5 + $0x8c] sm:$0xf]
    %v1652 = vld [vmem:[#allocation5 + $0x90] sm:$0xf]
    %v1653 = vld [vmem:[#allocation5 + $0x94] sm:$0xf]
    %v1654 = vld [vmem:[#allocation5 + $0x98] sm:$0xf]
    %v1655 = vld [vmem:[#allocation5 + $0x9c] sm:$0xf]
    %v1656 = vld [vmem:[#allocation5 + $0xa0] sm:$0xf]
    %v1657 = vld [vmem:[#allocation5 + $0xa4] sm:$0xf]
    %v1658 = vld [vmem:[#allocation5 + $0xa8] sm:$0xf]
    %v1659 = vld [vmem:[#allocation5 + $0xac] sm:$0xf]
    %v1660 = vld [vmem:[#allocation5 + $0xb0] sm:$0xf]
    %v1661 = vld [vmem:[#allocation5 + $0xb4] sm:$0xf]
    %v1662 = vld [vmem:[#allocation5 + $0xb8] sm:$0xf]
    %v1663 = vld [vmem:[#allocation5 + $0xbc] sm:$0xf]
    %v1664 = vld [vmem:[#allocation5 + $0xc0] sm:$0xf]
    %v1665 = vld [vmem:[#allocation5 + $0xc4] sm:$0xf]
    %v1666 = vld [vmem:[#allocation5 + $0xc8] sm:$0xf]
    %v1667 = vld [vmem:[#allocation5 + $0xcc] sm:$0xf]
    %v1668 = vld [vmem:[#allocation5 + $0xd0] sm:$0xf]
    %v1669 = vld [vmem:[#allocation5 + $0xd4] sm:$0xf]
    %v1670 = vld [vmem:[#allocation5 + $0xd8] sm:$0xf]
    %v1671 = vld [vmem:[#allocation5 + $0xdc] sm:$0xf]
    %v1672 = vld [vmem:[#allocation5 + $0xe0] sm:$0xf]
    %v1673 = vld [vmem:[#allocation5 + $0xe4] sm:$0xf]
    %v1674 = vld [vmem:[#allocation5 + $0xe8] sm:$0xf]
    %v1675 = vld [vmem:[#allocation5 + $0xec] sm:$0xf]
    %v1676 = vld [vmem:[#allocation5 + $0xf0] sm:$0xf]
    %v1677 = vld [vmem:[#allocation5 + $0xf4] sm:$0xf]
    %v1678 = vld [vmem:[#allocation5 + $0xf8] sm:$0xf]
    %v1679 = vld [vmem:[#allocation5 + $0xfc] sm:$0xf]
    %v1680 = vld [vmem:[%s4] sm:$0x1]
    %v1682 = vlaneseq
    %v1683 = vshrl.u32 %v1682, 7
    %v1684 = vsub.s32 0, %v1683
    %v1685 = vrot.slane %v1680, %v1684
    %v1751 = vunpack.c.l.b16 %v1616
    %v1752 = vunpack.c.l.b16 %v1617
    %v1753 = vunpack.c.l.b16 %v1618
    %v1754 = vunpack.c.l.b16 %v1619
    %v1755 = vunpack.c.l.b16 %v1620
    %v1756 = vunpack.c.l.b16 %v1621
    %v1757 = vunpack.c.l.b16 %v1622
    %v1758 = vunpack.c.l.b16 %v1623
    %v1759 = vunpack.c.l.b16 %v1624
    %v1760 = vunpack.c.l.b16 %v1625
    %v1761 = vunpack.c.l.b16 %v1626
    %v1762 = vunpack.c.l.b16 %v1627
    %v1763 = vunpack.c.l.b16 %v1628
    %v1764 = vunpack.c.l.b16 %v1629
    %v1765 = vunpack.c.l.b16 %v1630
    %v1766 = vunpack.c.l.b16 %v1631
    %v1767 = vunpack.c.l.b16 %v1632
    %v1768 = vunpack.c.l.b16 %v1633
    %v1769 = vunpack.c.l.b16 %v1634
    %v1770 = vunpack.c.l.b16 %v1635
    %v1771 = vunpack.c.l.b16 %v1636
    %v1772 = vunpack.c.l.b16 %v1637
    %v1773 = vunpack.c.l.b16 %v1638
    %v1774 = vunpack.c.l.b16 %v1639
    %v1775 = vunpack.c.l.b16 %v1640
    %v1776 = vunpack.c.l.b16 %v1641
    %v1777 = vunpack.c.l.b16 %v1642
    %v1778 = vunpack.c.l.b16 %v1643
    %v1779 = vunpack.c.l.b16 %v1644
    %v1780 = vunpack.c.l.b16 %v1645
    %v1781 = vunpack.c.l.b16 %v1646
    %v1782 = vunpack.c.l.b16 %v1647
    %v1783 = vunpack.c.l.b16 %v1648
    %v1784 = vunpack.c.l.b16 %v1649
    %v1785 = vunpack.c.l.b16 %v1650
    %v1786 = vunpack.c.l.b16 %v1651
    %v1787 = vunpack.c.l.b16 %v1652
    %v1788 = vunpack.c.l.b16 %v1653
    %v1789 = vunpack.c.l.b16 %v1654
    %v1790 = vunpack.c.l.b16 %v1655
    %v1791 = vunpack.c.l.b16 %v1656
    %v1792 = vunpack.c.l.b16 %v1657
    %v1793 = vunpack.c.l.b16 %v1658
    %v1794 = vunpack.c.l.b16 %v1659
    %v1795 = vunpack.c.l.b16 %v1660
    %v1796 = vunpack.c.l.b16 %v1661
    %v1797 = vunpack.c.l.b16 %v1662
    %v1798 = vunpack.c.l.b16 %v1663
    %v1799 = vunpack.c.l.b16 %v1664
    %v1800 = vunpack.c.l.b16 %v1665
    %v1801 = vunpack.c.l.b16 %v1666
    %v1802 = vunpack.c.l.b16 %v1667
    %v1803 = vunpack.c.l.b16 %v1668
    %v1804 = vunpack.c.l.b16 %v1669
    %v1805 = vunpack.c.l.b16 %v1670
    %v1806 = vunpack.c.l.b16 %v1671
    %v1807 = vunpack.c.l.b16 %v1672
    %v1808 = vunpack.c.l.b16 %v1673
    %v1809 = vunpack.c.l.b16 %v1674
    %v1810 = vunpack.c.l.b16 %v1675
    %v1811 = vunpack.c.l.b16 %v1676
    %v1812 = vunpack.c.l.b16 %v1677
    %v1813 = vunpack.c.l.b16 %v1678
    %v1814 = vunpack.c.l.b16 %v1679
    %v1815 = vpack.c.b16 %v1752, %v1751
    %v1816 = vpack.c.b16 %v1754, %v1753
    %v1817 = vpack.c.b16 %v1756, %v1755
    %v1818 = vpack.c.b16 %v1758, %v1757
    %v1819 = vpack.c.b16 %v1760, %v1759
    %v1820 = vpack.c.b16 %v1762, %v1761
    %v1821 = vpack.c.b16 %v1764, %v1763
    %v1822 = vpack.c.b16 %v1766, %v1765
    %v1823 = vpack.c.b16 %v1768, %v1767
    %v1824 = vpack.c.b16 %v1770, %v1769
    %v1825 = vpack.c.b16 %v1772, %v1771
    %v1826 = vpack.c.b16 %v1774, %v1773
    %v1827 = vpack.c.b16 %v1776, %v1775
    %v1828 = vpack.c.b16 %v1778, %v1777
    %v1829 = vpack.c.b16 %v1780, %v1779
    %v1830 = vpack.c.b16 %v1782, %v1781
    %v1831 = vpack.c.b16 %v1784, %v1783
    %v1832 = vpack.c.b16 %v1786, %v1785
    %v1833 = vpack.c.b16 %v1788, %v1787
    %v1834 = vpack.c.b16 %v1790, %v1789
    %v1835 = vpack.c.b16 %v1792, %v1791
    %v1836 = vpack.c.b16 %v1794, %v1793
    %v1837 = vpack.c.b16 %v1796, %v1795
    %v1838 = vpack.c.b16 %v1798, %v1797
    %v1839 = vpack.c.b16 %v1800, %v1799
    %v1840 = vpack.c.b16 %v1802, %v1801
    %v1841 = vpack.c.b16 %v1804, %v1803
    %v1842 = vpack.c.b16 %v1806, %v1805
    %v1843 = vpack.c.b16 %v1808, %v1807
    %v1844 = vpack.c.b16 %v1810, %v1809
    %v1845 = vpack.c.b16 %v1812, %v1811
    %v1846 = vpack.c.b16 %v1814, %v1813
    %1879 = vmatprep.subr.bf16.mxu0 0
    %1880 = vmatpush1.bf16.msra.mxu0 %v1822
    %1881 = vmatprep.subr.bf16.mxu0 0
    %1882 = vmatpush1.bf16.msra.mxu0 %v1821
    %1883 = vmatprep.subr.bf16.mxu0 0
    %1884 = vmatpush1.bf16.msra.mxu0 %v1820
    %1885 = vmatprep.subr.bf16.mxu0 0
    %1886 = vmatpush1.bf16.msra.mxu0 %v1819
    %1887 = vmatprep.subr.bf16.mxu0 0
    %1888 = vmatpush1.bf16.msra.mxu0 %v1818
    %1889 = vmatprep.subr.bf16.mxu0 0
    %1890 = vmatpush1.bf16.msra.mxu0 %v1817
    %1891 = vmatprep.subr.bf16.mxu0 0
    %1892 = vmatpush1.bf16.msra.mxu0 %v1816
    %1893 = vmatprep.subr.bf16.mxu0 0
    %1894 = vmatpush1.bf16.msra.mxu0 %v1815
    %1895 = vmatprep.subr.bf16.mxu0 0
    %1896 = vmatpush2.bf16.msra.mxu0 %v1830
    %1897 = vmatprep.subr.bf16.mxu0 0
    %1898 = vmatpush2.bf16.msra.mxu0 %v1829
    %1899 = vmatprep.subr.bf16.mxu0 0
    %1900 = vmatpush2.bf16.msra.mxu0 %v1828
    %1901 = vmatprep.subr.bf16.mxu0 0
    %1902 = vmatpush2.bf16.msra.mxu0 %v1827
    %1903 = vmatprep.subr.bf16.mxu0 0
    %1904 = vmatpush2.bf16.msra.mxu0 %v1826
    %1905 = vmatprep.subr.bf16.mxu0 0
    %1906 = vmatpush2.bf16.msra.mxu0 %v1825
    %1907 = vmatprep.subr.bf16.mxu0 0
    %1908 = vmatpush2.bf16.msra.mxu0 %v1824
    %1909 = vmatprep.subr.bf16.mxu0 0
    %1910 = vmatpush2.bf16.msra.mxu0 %v1823
    %1911 = vmatprep.mubr.bf16.mxu0 %v1613
    %1912 = vmatmul.mubr.bf16.gmra.mxu0 %v1612
    %v1913 = vpop.f32.mrf.mxu0
    %v1914 = vadd.f32 %v1685, %v1913
    %v1915 = vpop.f32.mrf.mxu0
    %v1916 = vpop.f32.mrf.mxu0
    %v1917 = vpop.f32.mrf.mxu0
    %1918 = vdwg.mxu0
    %1919 = vmatprep.subr.bf16.mxu0 0
    %1920 = vmatpush1.bf16.msra.mxu0 %v1838
    %1921 = vmatprep.subr.bf16.mxu0 0
    %1922 = vmatpush1.bf16.msra.mxu0 %v1837
    %1923 = vmatprep.subr.bf16.mxu0 0
    %1924 = vmatpush1.bf16.msra.mxu0 %v1836
    %1925 = vmatprep.subr.bf16.mxu0 0
    %1926 = vmatpush1.bf16.msra.mxu0 %v1835
    %1927 = vmatprep.subr.bf16.mxu0 0
    %1928 = vmatpush1.bf16.msra.mxu0 %v1834
    %1929 = vmatprep.subr.bf16.mxu0 0
    %1930 = vmatpush1.bf16.msra.mxu0 %v1833
    %1931 = vmatprep.subr.bf16.mxu0 0
    %1932 = vmatpush1.bf16.msra.mxu0 %v1832
    %1933 = vmatprep.subr.bf16.mxu0 0
    %1934 = vmatpush1.bf16.msra.mxu0 %v1831
    %1935 = vmatprep.subr.bf16.mxu0 0
    %1936 = vmatpush2.bf16.msra.mxu0 %v1846
    %1937 = vmatprep.subr.bf16.mxu0 0
    %1938 = vmatpush2.bf16.msra.mxu0 %v1845
    %1939 = vmatprep.subr.bf16.mxu0 0
    %1940 = vmatpush2.bf16.msra.mxu0 %v1844
    %1941 = vmatprep.subr.bf16.mxu0 0
    %1942 = vmatpush2.bf16.msra.mxu0 %v1843
    %1943 = vmatprep.subr.bf16.mxu0 0
    %1944 = vmatpush2.bf16.msra.mxu0 %v1842
    %1945 = vmatprep.subr.bf16.mxu0 0
    %1946 = vmatpush2.bf16.msra.mxu0 %v1841
    %1947 = vmatprep.subr.bf16.mxu0 0
    %1948 = vmatpush2.bf16.msra.mxu0 %v1840
    %1949 = vmatprep.subr.bf16.mxu0 0
    %1950 = vmatpush2.bf16.msra.mxu0 %v1839
    %1951 = vmatprep.mubr.bf16.mxu0 %v1615
    %1952 = vmatmul.mubr.bf16.gmra.mxu0 %v1614
    %v1953 = vpop.f32.mrf.mxu0
    %v1954 = vadd.f32 %v1914, %v1953
    %v1955 = vpop.f32.mrf.mxu0
    %v1956 = vpop.f32.mrf.mxu0
    %v1957 = vpop.f32.mrf.mxu0
    %1958 = vdwg.mxu0
    %1959 = vst [vmem:[#allocation7] sm:$0xff] %v1954
    // Predicated region
    $region30: #{neural_net_forward.1} parent=1 // pred_check
      _
    $region31: #{neural_net_forward.1} parent=1 // pred_check_branch
      %1961 = sbr.rel (0) target = $region33
    $region32: #{neural_net_forward.1} parent=1 // pred_region
      %s1963 = ssub.s32 128, 128
      %1964 = vsyncadd [#allocation4], %s1963
      %s1966 = sshll.u32 [#allocation7], 4
      %s1967 = int_to_ptr.vmem [resolvable:$true] %s1966
      %1969 = dma.vmem_to_hbm [thread:$0]  %s1967, 128, %s5, [#allocation4]
    $region33: #{neural_net_forward.1} parent=1 // pred_fallthru
      _
    // Predicated region
    $region34: #{neural_net_forward.1} parent=1 // pred_check
      _
    $region35: #{neural_net_forward.1} parent=1 // pred_check_branch
      %1971 = sbr.rel (0) target = $region37
    $region36: #{neural_net_forward.1} parent=1 // pred_region
      %1972 = dma.done [#allocation4], 128
    $region37: #{neural_net_forward.1} parent=1 // pred_fallthru
      _
    %1973 = vsyncpa [#allocation3], 1
    %1974 = vsyncpa [#allocation6], 1
    %1975 = vsyncpa [#allocation4], 1

</llo_original>
